<compile_context>
chip_gen: v7x
topology: tpu7x:2x2x1
jax: 0.10.0
libtpu: 0.0.40
codegen_flags: <defaults>
</compile_context>

<pallas_src>
import functools

import jax
import jax.numpy as jnp
from jax.experimental import pallas as pl
from jax.experimental.pallas import tpu as pltpu


def decoder_kernel(z_ref, w1_ref, b1_ref, w2_ref, b2_ref, w3_ref, b3_ref,
                   out_ref):
    z = z_ref[...]                                            # (block_m, 32) bf16

    # hidden layer 1: Linear + ReLU   (32 -> 128)
    h1 = jnp.dot(z, w1_ref[...], preferred_element_type=jnp.float32) + b1_ref[...]
    h1 = jnp.maximum(h1, 0.0).astype(w2_ref.dtype)

    # hidden layer 2: Linear + ReLU   (128 -> 256)
    h2 = jnp.dot(h1, w2_ref[...], preferred_element_type=jnp.float32) + b2_ref[...]
    h2 = jnp.maximum(h2, 0.0).astype(w3_ref.dtype)

    # output layer: Linear + sigmoid  (256 -> 784)
    logits = (jnp.dot(h2, w3_ref[...], preferred_element_type=jnp.float32)
              + b3_ref[...])
    # sigmoid(x) = 0.5 * (tanh(x/2) + 1): one EUP transcendental, f32-stable.
    out_ref[...] = (0.5 * (jnp.tanh(0.5 * logits) + 1.0)).astype(out_ref.dtype)


@functools.partial(jax.jit, static_argnames=("block_m",))
def decoder_forward(z, params, *, block_m=256):
    w1, b1, w2, b2, w3, b3 = params
    n, z_dim = z.shape
    h1_dim, h2_dim = w1.shape[1], w2.shape[1]
    x_dim = w3.shape[1]

    # Row tile: multiple of 8 sublanes; pad batch to a tile multiple so any
    # batch size is accepted (padded rows are dropped at the end).
    bm = max(8, (min(block_m, n) // 8) * 8)
    n_pad = ((n + bm - 1) // bm) * bm

    # bf16 matmul operands; biases remain f32 (added after f32 accumulation).
    zb = z.astype(jnp.bfloat16)
    if n_pad != n:
        zb = jnp.pad(zb, ((0, n_pad - n), (0, 0)))
    w1b, w2b, w3b = (w.astype(jnp.bfloat16) for w in (w1, w2, w3))

    # Grid-invariant (constant index_map) weight/bias specs: DMA'd once,
    # reused for every batch tile.
    full2d = lambda a: pl.BlockSpec(a.shape, lambda i: (0, 0))

    grid_spec = pltpu.PrefetchScalarGridSpec(
        num_scalar_prefetch=0,
        grid=(n_pad // bm,),
        in_specs=[
            pl.BlockSpec((bm, z_dim), lambda i: (i, 0)),   # z tile
            full2d(w1b), full2d(b1),
            full2d(w2b), full2d(b2),
            full2d(w3b), full2d(b3),
        ],
        out_specs=pl.BlockSpec((bm, x_dim), lambda i: (i, 0)),
    )

    flops = 2 * n_pad * (z_dim * h1_dim + h1_dim * h2_dim + h2_dim * x_dim)
    bytes_accessed = (
        zb.size * 2                                     # bf16 input
        + (w1b.size + w2b.size + w3b.size) * 2          # bf16 weights
        + (b1.size + b2.size + b3.size) * 4             # f32 biases
        + n_pad * x_dim * 4)                            # f32 output
    cost = pl.CostEstimate(flops=flops,
                           transcendentals=n_pad * x_dim,
                           bytes_accessed=bytes_accessed)

    recon = pl.pallas_call(
        decoder_kernel,
        out_shape=jax.ShapeDtypeStruct((n_pad, x_dim), jnp.float32),
        grid_spec=grid_spec,
        compiler_params=pltpu.CompilerParams(
            dimension_semantics=("parallel",)),          # megacore-shard batch
        cost_estimate=cost,
    )(zb, w1b, b1, w2b, b2, w3b, b3)
    return recon[:n]


def init_linear(key, fan_in, fan_out):
    """PyTorch nn.Linear default init: U(-1/sqrt(fan_in), 1/sqrt(fan_in))."""
    kw, kb = jax.random.split(key)
    bound = 1.0 / (fan_in ** 0.5)
    # Stored pre-transposed: (in_features, out_features).
    w = jax.random.uniform(kw, (fan_in, fan_out), jnp.float32, -bound, bound)
    b = jax.random.uniform(kb, (1, fan_out), jnp.float32, -bound, bound)
    return w, b


def reference_forward(z, params):
    """Plain-JAX reference using the same bf16 operand cast as the kernel."""
    w1, b1, w2, b2, w3, b3 = params
    f = jnp.bfloat16
    h = jax.nn.relu(jnp.dot(z.astype(f), w1.astype(f),
                            preferred_element_type=jnp.float32) + b1)
    h = jax.nn.relu(jnp.dot(h.astype(f), w2.astype(f),
                            preferred_element_type=jnp.float32) + b2)
    logits = jnp.dot(h.astype(f), w3.astype(f),
                     preferred_element_type=jnp.float32) + b3
    return jax.nn.sigmoid(logits)


if __name__ == "__main__":
    # Decoder dims: z_dim=32, h_dim=[128, 256] (reversed encoder h), x_dim=784
    z_dim, h_dims, x_dim = 32, [128, 256], 784
    batch = 256

    key = jax.random.PRNGKey(0)
    k_z, k1, k2, k3 = jax.random.split(key, 4)

    w1, b1 = init_linear(k1, z_dim, h_dims[0])
    w2, b2 = init_linear(k2, h_dims[0], h_dims[1])
    w3, b3 = init_linear(k3, h_dims[1], x_dim)
    params = (w1, b1, w2, b2, w3, b3)

    z = jax.random.normal(k_z, (batch, z_dim), jnp.float32)

    # block_m=128 -> grid=2 so both TensorCores get a tile on v7x.
    recon = decoder_forward(z, params, block_m=128)
    jax.block_until_ready(recon)

    # sanity checks against a plain-JAX reference (bf16 operands, f32 accum)
    ref = reference_forward(z, params)
    assert recon.shape == (batch, x_dim)
    assert bool(jnp.all((recon >= 0.0) & (recon <= 1.0)))
    assert jnp.allclose(recon, ref, atol=2e-3, rtol=2e-3)

    print("KERNEL_OK")
</pallas_src>

<mosaic_0001>
module attributes {stable_mosaic.version = 11 : i64} {
  func.func @decoder_kernel(%arg0: i32, %arg1: memref<128x32xbf16, #tpu.memory_space<vmem>>, %arg2: memref<32x128xbf16, #tpu.memory_space<vmem>>, %arg3: memref<1x128xf32, #tpu.memory_space<vmem>>, %arg4: memref<128x256xbf16, #tpu.memory_space<vmem>>, %arg5: memref<1x256xf32, #tpu.memory_space<vmem>>, %arg6: memref<256x784xbf16, #tpu.memory_space<vmem>>, %arg7: memref<1x784xf32, #tpu.memory_space<vmem>>, %arg8: memref<128x784xf32, #tpu.memory_space<vmem>>) attributes {dimension_semantics = [#tpu.dimension_semantics<parallel>], iteration_bounds = array<i64: 2>, scalar_prefetch = 0 : i64, scratch_operands = 0 : i64, tpu.core_type = #tpu.core_type<tc>, window_params = [{transform_indices = @transform_0, window_bounds = array<i64: 128, 32>}, {pipeline_mode = #tpu.pipeline_mode<synchronous>, transform_indices = @transform_1, window_bounds = array<i64: 32, 128>}, {pipeline_mode = #tpu.pipeline_mode<synchronous>, transform_indices = @transform_2, window_bounds = array<i64: 1, 128>}, {pipeline_mode = #tpu.pipeline_mode<synchronous>, transform_indices = @transform_3, window_bounds = array<i64: 128, 256>}, {pipeline_mode = #tpu.pipeline_mode<synchronous>, transform_indices = @transform_4, window_bounds = array<i64: 1, 256>}, {pipeline_mode = #tpu.pipeline_mode<synchronous>, transform_indices = @transform_5, window_bounds = array<i64: 256, 784>}, {pipeline_mode = #tpu.pipeline_mode<synchronous>, transform_indices = @transform_6, window_bounds = array<i64: 1, 784>}, {transform_indices = @transform_7, window_bounds = array<i64: 128, 784>}]} {
    %c0 = arith.constant 0 : index
    %c0_0 = arith.constant 0 : index
    %0 = vector.load %arg1[%c0, %c0_0] : memref<128x32xbf16, #tpu.memory_space<vmem>>, vector<128x32xbf16>
    %c0_1 = arith.constant 0 : index
    %c0_2 = arith.constant 0 : index
    %1 = vector.load %arg2[%c0_1, %c0_2] : memref<32x128xbf16, #tpu.memory_space<vmem>>, vector<32x128xbf16>
    %cst = arith.constant dense<0.000000e+00> : vector<128x128xf32>
    %2 = tpu.matmul %0, %1, %cst {dimension_numbers = #tpu.dot_dimension_numbers<[1], [0], [0], [1], [0, 0, 1, 1], [], []>} : vector<128x32xbf16>, vector<32x128xbf16>, vector<128x128xf32> -> vector<128x128xf32>
    %c0_3 = arith.constant 0 : index
    %c0_4 = arith.constant 0 : index
    %3 = vector.load %arg3[%c0_3, %c0_4] : memref<1x128xf32, #tpu.memory_space<vmem>>, vector<1x128xf32>
    %4 = vector.broadcast %3 : vector<1x128xf32> to vector<128x128xf32>
    %5 = arith.addf %2, %4 : vector<128x128xf32>
    %cst_5 = arith.constant 0.000000e+00 : f32
    %6 = vector.broadcast %cst_5 : f32 to vector<128x128xf32>
    %7 = arith.maximumf %5, %6 : vector<128x128xf32>
    %8 = arith.truncf %7 : vector<128x128xf32> to vector<128x128xbf16>
    %c0_6 = arith.constant 0 : index
    %c0_7 = arith.constant 0 : index
    %9 = vector.load %arg4[%c0_6, %c0_7] : memref<128x256xbf16, #tpu.memory_space<vmem>>, vector<128x256xbf16>
    %cst_8 = arith.constant dense<0.000000e+00> : vector<128x256xf32>
    %10 = tpu.matmul %8, %9, %cst_8 {dimension_numbers = #tpu.dot_dimension_numbers<[1], [0], [0], [1], [0, 0, 1, 1], [], []>} : vector<128x128xbf16>, vector<128x256xbf16>, vector<128x256xf32> -> vector<128x256xf32>
    %c0_9 = arith.constant 0 : index
    %c0_10 = arith.constant 0 : index
    %11 = vector.load %arg5[%c0_9, %c0_10] : memref<1x256xf32, #tpu.memory_space<vmem>>, vector<1x256xf32>
    %12 = vector.broadcast %11 : vector<1x256xf32> to vector<128x256xf32>
    %13 = arith.addf %10, %12 : vector<128x256xf32>
    %cst_11 = arith.constant 0.000000e+00 : f32
    %14 = vector.broadcast %cst_11 : f32 to vector<128x256xf32>
    %15 = arith.maximumf %13, %14 : vector<128x256xf32>
    %16 = arith.truncf %15 : vector<128x256xf32> to vector<128x256xbf16>
    %c0_12 = arith.constant 0 : index
    %c0_13 = arith.constant 0 : index
    %17 = vector.load %arg6[%c0_12, %c0_13] : memref<256x784xbf16, #tpu.memory_space<vmem>>, vector<256x784xbf16>
    %cst_14 = arith.constant dense<0.000000e+00> : vector<128x784xf32>
    %18 = tpu.matmul %16, %17, %cst_14 {dimension_numbers = #tpu.dot_dimension_numbers<[1], [0], [0], [1], [0, 0, 1, 1], [], []>} : vector<128x256xbf16>, vector<256x784xbf16>, vector<128x784xf32> -> vector<128x784xf32>
    %c0_15 = arith.constant 0 : index
    %c0_16 = arith.constant 0 : index
    %19 = vector.load %arg7[%c0_15, %c0_16] : memref<1x784xf32, #tpu.memory_space<vmem>>, vector<1x784xf32>
    %20 = vector.broadcast %19 : vector<1x784xf32> to vector<128x784xf32>
    %21 = arith.addf %18, %20 : vector<128x784xf32>
    %cst_17 = arith.constant 5.000000e-01 : f32
    %22 = vector.broadcast %cst_17 : f32 to vector<128x784xf32>
    %23 = arith.mulf %22, %21 : vector<128x784xf32>
    %24 = math.tanh %23 : vector<128x784xf32>
    %cst_18 = arith.constant 1.000000e+00 : f32
    %25 = vector.broadcast %cst_18 : f32 to vector<128x784xf32>
    %26 = arith.addf %24, %25 : vector<128x784xf32>
    %cst_19 = arith.constant 5.000000e-01 : f32
    %27 = vector.broadcast %cst_19 : f32 to vector<128x784xf32>
    %28 = arith.mulf %27, %26 : vector<128x784xf32>
    %c0_20 = arith.constant 0 : index
    %c0_21 = arith.constant 0 : index
    %29 = vector.load %arg8[%c0_20, %c0_21] : memref<128x784xf32, #tpu.memory_space<vmem>>, vector<128x784xf32>
    tpu.vector_store %arg8[%c0_20, %c0_21], %28 {strides = array<i32>} : memref<128x784xf32, #tpu.memory_space<vmem>>, vector<128x784xf32>,
    return
  }
  func.func @transform_0(%arg0: i32) -> (i32, i32) {
    %c0_i32 = arith.constant 0 : i32
    %c0_i32_0 = arith.constant 0 : i32
    return %arg0, %c0_i32 : i32, i32
  }
  func.func @transform_1(%arg0: i32) -> (i32, i32) {
    %c0_i32 = arith.constant 0 : i32
    %c0_i32_0 = arith.constant 0 : i32
    %c0_i32_1 = arith.constant 0 : i32
    return %c0_i32, %c0_i32_0 : i32, i32
  }
  func.func @transform_2(%arg0: i32) -> (i32, i32) {
    %c0_i32 = arith.constant 0 : i32
    %c0_i32_0 = arith.constant 0 : i32
    %c0_i32_1 = arith.constant 0 : i32
    return %c0_i32, %c0_i32_0 : i32, i32
  }
  func.func @transform_3(%arg0: i32) -> (i32, i32) {
    %c0_i32 = arith.constant 0 : i32
    %c0_i32_0 = arith.constant 0 : i32
    %c0_i32_1 = arith.constant 0 : i32
    return %c0_i32, %c0_i32_0 : i32, i32
  }
  func.func @transform_4(%arg0: i32) -> (i32, i32) {
    %c0_i32 = arith.constant 0 : i32
    %c0_i32_0 = arith.constant 0 : i32
    %c0_i32_1 = arith.constant 0 : i32
    return %c0_i32, %c0_i32_0 : i32, i32
  }
  func.func @transform_5(%arg0: i32) -> (i32, i32) {
    %c0_i32 = arith.constant 0 : i32
    %c0_i32_0 = arith.constant 0 : i32
    %c0_i32_1 = arith.constant 0 : i32
    return %c0_i32, %c0_i32_0 : i32, i32
  }
  func.func @transform_6(%arg0: i32) -> (i32, i32) {
    %c0_i32 = arith.constant 0 : i32
    %c0_i32_0 = arith.constant 0 : i32
    %c0_i32_1 = arith.constant 0 : i32
    return %c0_i32, %c0_i32_0 : i32, i32
  }
  func.func @transform_7(%arg0: i32) -> (i32, i32) {
    %c0_i32 = arith.constant 0 : i32
    %c0_i32_0 = arith.constant 0 : i32
    return %arg0, %c0_i32 : i32, i32
  }
}

</mosaic_0001>

<llo_original>
// kernel: decoder_forward.1
$region0: #{decoder_forward.1}
  #allocation0 [shape = 'u32[]', space=smem, size = 0x4, offset = 0x4, fixed_abs, tag = 'smem constant byte address 0x4 - core index']
  #allocation1 [shape = 'u32[144,128]{1,0:T(1,128)}', space=vmem, size = 0x12000, scoped, tag = 'internal scratch']
  %s0 = inlined_call_operand.vmem [shape: bf16[256,32], index: 0, kind: input, shape index: {}]
  %s1 = inlined_call_operand.vmem [shape: bf16[32,128], index: 1, kind: input, shape index: {}]
  %s2 = inlined_call_operand.vmem [shape: f32[1,128], index: 2, kind: input, shape index: {}]
  %s3 = inlined_call_operand.vmem [shape: bf16[128,256], index: 3, kind: input, shape index: {}]
  %s4 = inlined_call_operand.vmem [shape: f32[1,256], index: 4, kind: input, shape index: {}]
  %s5 = inlined_call_operand.vmem [shape: bf16[256,784], index: 5, kind: input, shape index: {}]
  %s6 = inlined_call_operand.vmem [shape: f32[1,784], index: 6, kind: input, shape index: {}]
  %s7 = inlined_call_operand.vmem [shape: f32[256,784], index: 7, kind: output, shape index: {}]
  %s8 = sld [smem:[#allocation0]]
  $region61: #{decoder_forward.1} parent=0
    _
  %s10 = ssub.s32 1, %s8
  %s11 = scalar_select 0, %s10, %s8
  loop: start=0, step=1, limit=4
  $region2: #{decoder_forward.1} parent=0 // loop_pre_header
    _
  $region3: #{decoder_forward.1} parent=0 // loop_header
    %s13 = sphi 0, %s17
    %p14 = scmp.ge.s32.totalorder %s13, 4
    %s23 = sphi 0, %s25
    %s26 = sphi 0, %s23
    %s27 = sphi 0, %s26
    %s43 = sphi 0, %s27
    %s47 = sphi 0, %s47
    %s49 = sphi 0, %s47
    %s50 = sphi 0, %s49
    %s64 = sphi 0, %s50
    %s68 = sphi 0, %s68
    %s70 = sphi 0, %s68
    %s71 = sphi 0, %s70
    %s85 = sphi 0, %s71
    %s89 = sphi 0, %s89
    %s91 = sphi 0, %s89
    %s92 = sphi 0, %s91
    %s106 = sphi 0, %s92
    %s110 = sphi 0, %s110
    %s112 = sphi 0, %s110
    %s113 = sphi 0, %s112
    %s127 = sphi 0, %s113
    %s131 = sphi 0, %s131
    %s133 = sphi 0, %s131
    %s134 = sphi 0, %s133
    %s148 = sphi 0, %s134
    %s152 = sphi 0, %s152
    %s154 = sphi 0, %s152
    %s155 = sphi 0, %s154
    %s169 = sphi 0, %s155
    %s175 = sphi 0, %s177
    %s178 = sphi 0, %s175
    %s179 = sphi 0, %s178
    %s195 = sphi 0, %s179
  $region4: #{decoder_forward.1} parent=0 // loop_header_branch
    %16 = sbr.rel (%p14) target = $region8
  $region5: #{decoder_forward.1} parent=0 // loop_body
    %s18 = ssub.s32 %s13, 1
    %s19 = ssub.s32 %s13, 2
    %s20 = sadd.s32 %s13, 1
    %s21 = ssub.s32 %s13, %s20
    %p22 = scmp.eq.s32.totalorder %s21, 0
    %s24 = sadd.s32 %s23, 1
    %s25 = scalar_select %p22, %s23, %s24
    %p28 = pneg %p22
    %p29 = scmp.eq.s32.totalorder %s13, 1
    %p30 = por %p28, %p29
    %p31 = scmp.ne.s32.totalorder %s23, %s26
    %p32 = scmp.eq.s32.totalorder %s13, 0
    %p33 = por %p31, %p32
    %p34 = scmp.ne.s32.totalorder %s23, %s26
    %p35 = scmp.eq.s32.totalorder %s18, 1
    %p36 = por %p34, %p35
    %p37 = scmp.ne.s32.totalorder %s26, %s27
    %p38 = scmp.eq.s32.totalorder %s18, 0
    %p39 = por %p37, %p38
    %p40 = scmp.ne.s32.totalorder %s26, %s27
    %p41 = scmp.eq.s32.totalorder %s19, 1
    %p42 = por %p40, %p41
    %p44 = scmp.ne.s32.totalorder %s27, %s43
    %p45 = scmp.eq.s32.totalorder %s19, 0
    %p46 = por %p44, %p45
    %s48 = sadd.s32 %s47, 1
    %p51 = scmp.eq.s32.totalorder %s13, 1
    %p52 = scmp.ne.s32.totalorder %s47, %s49
    %p53 = scmp.eq.s32.totalorder %s13, 0
    %p54 = por %p52, %p53
    %p55 = scmp.ne.s32.totalorder %s47, %s49
    %p56 = scmp.eq.s32.totalorder %s18, 1
    %p57 = por %p55, %p56
    %p58 = scmp.ne.s32.totalorder %s49, %s50
    %p59 = scmp.eq.s32.totalorder %s18, 0
    %p60 = por %p58, %p59
    %p61 = scmp.ne.s32.totalorder %s49, %s50
    %p62 = scmp.eq.s32.totalorder %s19, 1
    %p63 = por %p61, %p62
    %p65 = scmp.ne.s32.totalorder %s50, %s64
    %p66 = scmp.eq.s32.totalorder %s19, 0
    %p67 = por %p65, %p66
    %s69 = sadd.s32 %s68, 1
    %p72 = scmp.eq.s32.totalorder %s13, 1
    %p73 = scmp.ne.s32.totalorder %s68, %s70
    %p74 = scmp.eq.s32.totalorder %s13, 0
    %p75 = por %p73, %p74
    %p76 = scmp.ne.s32.totalorder %s68, %s70
    %p77 = scmp.eq.s32.totalorder %s18, 1
    %p78 = por %p76, %p77
    %p79 = scmp.ne.s32.totalorder %s70, %s71
    %p80 = scmp.eq.s32.totalorder %s18, 0
    %p81 = por %p79, %p80
    %p82 = scmp.ne.s32.totalorder %s70, %s71
    %p83 = scmp.eq.s32.totalorder %s19, 1
    %p84 = por %p82, %p83
    %p86 = scmp.ne.s32.totalorder %s71, %s85
    %p87 = scmp.eq.s32.totalorder %s19, 0
    %p88 = por %p86, %p87
    %s90 = sadd.s32 %s89, 1
    %p93 = scmp.eq.s32.totalorder %s13, 1
    %p94 = scmp.ne.s32.totalorder %s89, %s91
    %p95 = scmp.eq.s32.totalorder %s13, 0
    %p96 = por %p94, %p95
    %p97 = scmp.ne.s32.totalorder %s89, %s91
    %p98 = scmp.eq.s32.totalorder %s18, 1
    %p99 = por %p97, %p98
    %p100 = scmp.ne.s32.totalorder %s91, %s92
    %p101 = scmp.eq.s32.totalorder %s18, 0
    %p102 = por %p100, %p101
    %p103 = scmp.ne.s32.totalorder %s91, %s92
    %p104 = scmp.eq.s32.totalorder %s19, 1
    %p105 = por %p103, %p104
    %p107 = scmp.ne.s32.totalorder %s92, %s106
    %p108 = scmp.eq.s32.totalorder %s19, 0
    %p109 = por %p107, %p108
    %s111 = sadd.s32 %s110, 1
    %p114 = scmp.eq.s32.totalorder %s13, 1
    %p115 = scmp.ne.s32.totalorder %s110, %s112
    %p116 = scmp.eq.s32.totalorder %s13, 0
    %p117 = por %p115, %p116
    %p118 = scmp.ne.s32.totalorder %s110, %s112
    %p119 = scmp.eq.s32.totalorder %s18, 1
    %p120 = por %p118, %p119
    %p121 = scmp.ne.s32.totalorder %s112, %s113
    %p122 = scmp.eq.s32.totalorder %s18, 0
    %p123 = por %p121, %p122
    %p124 = scmp.ne.s32.totalorder %s112, %s113
    %p125 = scmp.eq.s32.totalorder %s19, 1
    %p126 = por %p124, %p125
    %p128 = scmp.ne.s32.totalorder %s113, %s127
    %p129 = scmp.eq.s32.totalorder %s19, 0
    %p130 = por %p128, %p129
    %s132 = sadd.s32 %s131, 1
    %p135 = scmp.eq.s32.totalorder %s13, 1
    %p136 = scmp.ne.s32.totalorder %s131, %s133
    %p137 = scmp.eq.s32.totalorder %s13, 0
    %p138 = por %p136, %p137
    %p139 = scmp.ne.s32.totalorder %s131, %s133
    %p140 = scmp.eq.s32.totalorder %s18, 1
    %p141 = por %p139, %p140
    %p142 = scmp.ne.s32.totalorder %s133, %s134
    %p143 = scmp.eq.s32.totalorder %s18, 0
    %p144 = por %p142, %p143
    %p145 = scmp.ne.s32.totalorder %s133, %s134
    %p146 = scmp.eq.s32.totalorder %s19, 1
    %p147 = por %p145, %p146
    %p149 = scmp.ne.s32.totalorder %s134, %s148
    %p150 = scmp.eq.s32.totalorder %s19, 0
    %p151 = por %p149, %p150
    %s153 = sadd.s32 %s152, 1
    %p156 = scmp.eq.s32.totalorder %s13, 1
    %p157 = scmp.ne.s32.totalorder %s152, %s154
    %p158 = scmp.eq.s32.totalorder %s13, 0
    %p159 = por %p157, %p158
    %p160 = scmp.ne.s32.totalorder %s152, %s154
    %p161 = scmp.eq.s32.totalorder %s18, 1
    %p162 = por %p160, %p161
    %p163 = scmp.ne.s32.totalorder %s154, %s155
    %p164 = scmp.eq.s32.totalorder %s18, 0
    %p165 = por %p163, %p164
    %p166 = scmp.ne.s32.totalorder %s154, %s155
    %p167 = scmp.eq.s32.totalorder %s19, 1
    %p168 = por %p166, %p167
    %p170 = scmp.ne.s32.totalorder %s155, %s169
    %p171 = scmp.eq.s32.totalorder %s19, 0
    %p172 = por %p170, %p171
    %s173 = ssub.s32 %s13, %s20
    %p174 = scmp.eq.s32.totalorder %s173, 0
    %s176 = sadd.s32 %s175, 1
    %s177 = scalar_select %p174, %s175, %s176
    %p180 = pneg %p174
    %p181 = scmp.eq.s32.totalorder %s13, 1
    %p182 = por %p180, %p181
    %p183 = scmp.ne.s32.totalorder %s175, %s178
    %p184 = scmp.eq.s32.totalorder %s13, 0
    %p185 = por %p183, %p184
    %p186 = scmp.ne.s32.totalorder %s175, %s178
    %p187 = scmp.eq.s32.totalorder %s18, 1
    %p188 = por %p186, %p187
    %p189 = scmp.ne.s32.totalorder %s178, %s179
    %p190 = scmp.eq.s32.totalorder %s18, 0
    %p191 = por %p189, %p190
    %p192 = scmp.ne.s32.totalorder %s178, %s179
    %p193 = scmp.eq.s32.totalorder %s19, 1
    %p194 = por %p192, %p193
    %p196 = scmp.ne.s32.totalorder %s179, %s195
    %p197 = scmp.eq.s32.totalorder %s19, 0
    %p198 = por %p196, %p197
    %p199 = scmp.le.s32.totalorder 1, %s13
    %p200 = scmp.lt.s32.totalorder %s13, 3
    %p201 = pnand %p199, %p200
    %p202 = pneg %p201
    // Predicated region
    $region9: #{decoder_forward.1} parent=5 // pred_check
      _
    $region10: #{decoder_forward.1} parent=5 // pred_check_branch
      %204 = sbr.rel (%p201) target = $region12
    $region11: #{decoder_forward.1} parent=5 // pred_region
      %s205 = ssub.s32 %s13, 1
      // Predicated region
      $region13: #{decoder_forward.1} parent=11 // pred_check
        %p206 = pneg %p60
      $region14: #{decoder_forward.1} parent=11 // pred_check_branch
        %208 = sbr.rel (%p206) target = $region16
      $region15: #{decoder_forward.1} parent=11 // pred_region
        _
      $region16: #{decoder_forward.1} parent=11 // pred_fallthru
        _
      // Predicated region
      $region17: #{decoder_forward.1} parent=11 // pred_check
        %p209 = pneg %p81
      $region18: #{decoder_forward.1} parent=11 // pred_check_branch
        %211 = sbr.rel (%p209) target = $region20
      $region19: #{decoder_forward.1} parent=11 // pred_region
        _
      $region20: #{decoder_forward.1} parent=11 // pred_fallthru
        _
      // Predicated region
      $region21: #{decoder_forward.1} parent=11 // pred_check
        %p212 = pneg %p102
      $region22: #{decoder_forward.1} parent=11 // pred_check_branch
        %214 = sbr.rel (%p212) target = $region24
      $region23: #{decoder_forward.1} parent=11 // pred_region
        _
      $region24: #{decoder_forward.1} parent=11 // pred_fallthru
        _
      // Predicated region
      $region25: #{decoder_forward.1} parent=11 // pred_check
        %p215 = pneg %p123
      $region26: #{decoder_forward.1} parent=11 // pred_check_branch
        %217 = sbr.rel (%p215) target = $region28
      $region27: #{decoder_forward.1} parent=11 // pred_region
        _
      $region28: #{decoder_forward.1} parent=11 // pred_fallthru
        _
      // Predicated region
      $region29: #{decoder_forward.1} parent=11 // pred_check
        %p218 = pneg %p144
      $region30: #{decoder_forward.1} parent=11 // pred_check_branch
        %220 = sbr.rel (%p218) target = $region32
      $region31: #{decoder_forward.1} parent=11 // pred_region
        _
      $region32: #{decoder_forward.1} parent=11 // pred_fallthru
        _
      // Predicated region
      $region33: #{decoder_forward.1} parent=11 // pred_check
        %p221 = pneg %p165
      $region34: #{decoder_forward.1} parent=11 // pred_check_branch
        %223 = sbr.rel (%p221) target = $region36
      $region35: #{decoder_forward.1} parent=11 // pred_region
        _
      $region36: #{decoder_forward.1} parent=11 // pred_fallthru
        _
    $region12: #{decoder_forward.1} parent=5 // pred_fallthru
      _
    %p224 = scmp.lt.s32.totalorder %s13, 2
    // Predicated region
    $region37: #{decoder_forward.1} parent=5 // pred_check
      %p225 = pneg %p224
    $region38: #{decoder_forward.1} parent=5 // pred_check_branch
      %227 = sbr.rel (%p225) target = $region40
    $region39: #{decoder_forward.1} parent=5 // pred_region
      // Predicated region
      $region41: #{decoder_forward.1} parent=39 // pred_check
        %p228 = pneg %p33
      $region42: #{decoder_forward.1} parent=39 // pred_check_branch
        %230 = sbr.rel (%p228) target = $region44
      $region43: #{decoder_forward.1} parent=39 // pred_region
        %s231 = smul.u32 16, %s13
        %p232 = scmp.lt.s32.totalorder %s231, 31
        %s233 = scalar_select %p232, %s231, 31
        %s234 = smul.addr %s233, 4
        %s235 = scalar_lea.vmem %s0, %s234
        %s236 = smul.u32 16, %s13
      $region44: #{decoder_forward.1} parent=39 // pred_fallthru
        _
    $region40: #{decoder_forward.1} parent=5 // pred_fallthru
      _
    %p237 = scmp.le.s32.totalorder 1, %s13
    %p238 = scmp.lt.s32.totalorder %s13, 3
    %p239 = pnand %p237, %p238
    %p240 = pneg %p239
    // Predicated region
    $region45: #{decoder_forward.1} parent=5 // pred_check
      _
    $region46: #{decoder_forward.1} parent=5 // pred_check_branch
      %242 = sbr.rel (%p239) target = $region48
    $region47: #{decoder_forward.1} parent=5 // pred_region
      %s243 = ssub.s32 %s13, 1
      %s244 = smul.u32 16, %s18
      %p245 = scmp.lt.s32.totalorder %s244, 31
      %s246 = scalar_select %p245, %s244, 31
      %s247 = smul.addr %s246, 4
      %s248 = scalar_lea.vmem %s0, %s247
      %p249 = pneg %p39
      %p250 = pneg %p36
      %p251 = pneg %p60
      %p252 = pneg %p57
      %p253 = pneg %p81
      %p254 = pneg %p78
      %p255 = pneg %p102
      %p256 = pneg %p99
      %p257 = pneg %p123
      %p258 = pneg %p120
      %p259 = pneg %p144
      %p260 = pneg %p141
      %p261 = pneg %p165
      %p262 = pneg %p162
      %p263 = pneg %p191
      %p264 = pneg %p188
      %s265 = smul.u32 16, %s18
      %p266 = scmp.lt.s32.totalorder %s265, 31
      %s267 = scalar_select %p266, %s265, 31
      %s268 = smul.addr %s267, 7
      %s269 = smul.addr %s268, 8
      %s270 = scalar_lea.vmem %s7, %s269
      %s271 = smul.u32 16, %s18
      %p272 = scmp.lt.s32.totalorder %s271, 31
      %s273 = scalar_select %p272, %s271, 31
      %s274 = smul.addr %s273, 4
      %s275 = scalar_lea.vmem %s0, %s274
      %s276 = smul.u32 16, %s18
      %s277 = smul.u32 16, %s18
      %p278 = scmp.lt.s32.totalorder %s277, 31
      %s279 = scalar_select %p278, %s277, 31
      %s280 = smul.addr %s279, 7
      %s281 = smul.addr %s280, 8
      %s282 = scalar_lea.vmem %s7, %s281
      %s283 = smul.u32 16, %s18
      %v285 = vld [vmem:[%s275] sm:$0xf]
      %v286 = vld [vmem:[%s275 + $0x4] sm:$0xf]
      %v287 = vld [vmem:[%s275 + $0x8] sm:$0xf]
      %v288 = vld [vmem:[%s275 + $0xc] sm:$0xf]
      %v289 = vld [vmem:[%s275 + $0x10] sm:$0xf]
      %v290 = vld [vmem:[%s275 + $0x14] sm:$0xf]
      %v291 = vld [vmem:[%s275 + $0x18] sm:$0xf]
      %v292 = vld [vmem:[%s275 + $0x1c] sm:$0xf]
      %v293 = vld [vmem:[%s275 + $0x20] sm:$0xf]
      %v294 = vld [vmem:[%s275 + $0x24] sm:$0xf]
      %v295 = vld [vmem:[%s275 + $0x28] sm:$0xf]
      %v296 = vld [vmem:[%s275 + $0x2c] sm:$0xf]
      %v297 = vld [vmem:[%s275 + $0x30] sm:$0xf]
      %v298 = vld [vmem:[%s275 + $0x34] sm:$0xf]
      %v299 = vld [vmem:[%s275 + $0x38] sm:$0xf]
      %v300 = vld [vmem:[%s275 + $0x3c] sm:$0xf]
      %v301 = vld [vmem:[%s1] sm:$0xf]
      %v302 = vld [vmem:[%s1 + $0x4] sm:$0xf]
      %v303 = vld [vmem:[%s1 + $0x8] sm:$0xf]
      %v304 = vld [vmem:[%s1 + $0xc] sm:$0xf]
      %v305 = vld [vmem:[%s2] sm:$0x1]
      %v307 = vlaneseq
      %v308 = vshrl.u32 %v307, 7
      %v309 = vsub.s32 0, %v308
      %v310 = vrot.slane %v305, %v309
      %v328 = vunpack.c.l.b16 %v285
      %v329 = vunpack.c.l.b16 %v286
      %v330 = vunpack.c.l.b16 %v287
      %v331 = vunpack.c.l.b16 %v288
      %v332 = vunpack.c.l.b16 %v289
      %v333 = vunpack.c.l.b16 %v290
      %v334 = vunpack.c.l.b16 %v291
      %v335 = vunpack.c.l.b16 %v292
      %v336 = vunpack.c.l.b16 %v293
      %v337 = vunpack.c.l.b16 %v294
      %v338 = vunpack.c.l.b16 %v295
      %v339 = vunpack.c.l.b16 %v296
      %v340 = vunpack.c.l.b16 %v297
      %v341 = vunpack.c.l.b16 %v298
      %v342 = vunpack.c.l.b16 %v299
      %v343 = vunpack.c.l.b16 %v300
      %v344 = vpack.c.b16 %v329, %v328
      %v345 = vpack.c.b16 %v331, %v330
      %v346 = vpack.c.b16 %v333, %v332
      %v347 = vpack.c.b16 %v335, %v334
      %v348 = vpack.c.b16 %v337, %v336
      %v349 = vpack.c.b16 %v339, %v338
      %v350 = vpack.c.b16 %v341, %v340
      %v351 = vpack.c.b16 %v343, %v342
      %v356 = vunpack.c.l.b16 %v301
      %v357 = vunpack.c.l.b16 %v302
      %v358 = vunpack.c.l.b16 %v303
      %v359 = vunpack.c.l.b16 %v304
      %v360 = vpack.c.b16 %v357, %v356
      %v361 = vpack.c.b16 %v359, %v358
      %vm364 = vcmask 261120
      %v366 = vsel %vm364, %v344, 0
      %v369 = vsel %vm364, %v345, 0
      %v372 = vsel %vm364, %v346, 0
      %v375 = vsel %vm364, %v347, 0
      %v378 = vsel %vm364, %v348, 0
      %v381 = vsel %vm364, %v349, 0
      %v384 = vsel %vm364, %v350, 0
      %v387 = vsel %vm364, %v351, 0
      %389 = vmatprep.subr.bf16.mxu0 0
      %390 = vmatpush1.bf16.msra.mxu0 %v360
      %391 = vmatprep.subr.bf16.mxu0 0
      %392 = vmatpush1.bf16.msra.mxu0 %v361
      %393 = vmatprep.subr.bf16.mxu0 0
      %394 = vmatpush1.bf16.msra.mxu0 0
      %395 = vmatprep.subr.bf16.mxu0 0
      %396 = vmatpush1.bf16.msra.mxu0 0
      %397 = vmatprep.subr.bf16.mxu0 0
      %398 = vmatpush1.bf16.msra.mxu0 0
      %399 = vmatprep.subr.bf16.mxu0 0
      %400 = vmatpush1.bf16.msra.mxu0 0
      %401 = vmatprep.subr.bf16.mxu0 0
      %402 = vmatpush1.bf16.msra.mxu0 0
      %403 = vmatprep.subr.bf16.mxu0 0
      %404 = vmatpush1.bf16.msra.mxu0 0
      %405 = vmatprep.subr.bf16.mxu0 0
      %406 = vmatpush1.bf16.msra.mxu0 0
      %407 = vmatprep.subr.bf16.mxu0 0
      %408 = vmatpush1.bf16.msra.mxu0 0
      %409 = vmatprep.subr.bf16.mxu0 0
      %410 = vmatpush1.bf16.msra.mxu0 0
      %411 = vmatprep.subr.bf16.mxu0 0
      %412 = vmatpush1.bf16.msra.mxu0 0
      %413 = vmatprep.subr.bf16.mxu0 0
      %414 = vmatpush1.bf16.msra.mxu0 0
      %415 = vmatprep.subr.bf16.mxu0 0
      %416 = vmatpush1.bf16.msra.mxu0 0
      %417 = vmatprep.subr.bf16.mxu0 0
      %418 = vmatpush1.bf16.msra.mxu0 0
      %419 = vmatprep.subr.bf16.mxu0 0
      %420 = vmatpush1.bf16.msra.mxu0 0
      %421 = vmatprep.mubr.bf16.mxu0 0
      %422 = vmatmul.mubr.bf16.gmra.mrb[0].mxu0 %v366
      %v423 = vpop.f32.mrb[0].mxu0
      %v424 = vadd.f32 %v310, %v423
      %v425 = vpop.f32.mrb[0].mxu0
      %v426 = vpop.f32.mrb[0].mxu0
      %v427 = vadd.f32 %v310, %v426
      %v428 = vpop.f32.mrb[0].mxu0
      %429 = vmatprep.mubr.bf16.mxu0 0
      %430 = vmatmul.mubr.bf16.gmra.mrb[0].mxu0 %v369
      %v431 = vpop.f32.mrb[0].mxu0
      %v432 = vadd.f32 %v310, %v431
      %v433 = vpop.f32.mrb[0].mxu0
      %v434 = vpop.f32.mrb[0].mxu0
      %v435 = vadd.f32 %v310, %v434
      %v436 = vpop.f32.mrb[0].mxu0
      %437 = vmatprep.mubr.bf16.mxu0 0
      %438 = vmatmul.mubr.bf16.gmra.mrb[0].mxu0 %v372
      %v439 = vpop.f32.mrb[0].mxu0
      %v440 = vadd.f32 %v310, %v439
      %v441 = vpop.f32.mrb[0].mxu0
      %v442 = vpop.f32.mrb[0].mxu0
      %v443 = vadd.f32 %v310, %v442
      %v444 = vpop.f32.mrb[0].mxu0
      %445 = vmatprep.mubr.bf16.mxu0 0
      %446 = vmatmul.mubr.bf16.gmra.mrb[0].mxu0 %v375
      %v447 = vpop.f32.mrb[0].mxu0
      %v448 = vadd.f32 %v310, %v447
      %v449 = vpop.f32.mrb[0].mxu0
      %v450 = vpop.f32.mrb[0].mxu0
      %v451 = vadd.f32 %v310, %v450
      %v452 = vpop.f32.mrb[0].mxu0
      %453 = vmatprep.mubr.bf16.mxu0 0
      %454 = vmatmul.mubr.bf16.gmra.mrb[0].mxu0 %v378
      %v455 = vpop.f32.mrb[0].mxu0
      %v456 = vadd.f32 %v310, %v455
      %v457 = vpop.f32.mrb[0].mxu0
      %v458 = vpop.f32.mrb[0].mxu0
      %v459 = vadd.f32 %v310, %v458
      %v460 = vpop.f32.mrb[0].mxu0
      %461 = vmatprep.mubr.bf16.mxu0 0
      %462 = vmatmul.mubr.bf16.gmra.mrb[0].mxu0 %v381
      %v463 = vpop.f32.mrb[0].mxu0
      %v464 = vadd.f32 %v310, %v463
      %v465 = vpop.f32.mrb[0].mxu0
      %v466 = vpop.f32.mrb[0].mxu0
      %v467 = vadd.f32 %v310, %v466
      %v468 = vpop.f32.mrb[0].mxu0
      %469 = vmatprep.mubr.bf16.mxu0 0
      %470 = vmatmul.mubr.bf16.gmra.mrb[0].mxu0 %v384
      %v471 = vpop.f32.mrb[0].mxu0
      %v472 = vadd.f32 %v310, %v471
      %v473 = vpop.f32.mrb[0].mxu0
      %v474 = vpop.f32.mrb[0].mxu0
      %v475 = vadd.f32 %v310, %v474
      %v476 = vpop.f32.mrb[0].mxu0
      %477 = vmatprep.mubr.bf16.mxu0 0
      %478 = vmatmul.mubr.bf16.gmra.mrb[0].mxu0 %v387
      %v479 = vpop.f32.mrb[0].mxu0
      %v480 = vadd.f32 %v310, %v479
      %v481 = vpop.f32.mrb[0].mxu0
      %v482 = vpop.f32.mrb[0].mxu0
      %v483 = vadd.f32 %v310, %v482
      %v484 = vpop.f32.mrb[0].mxu0
      %485 = vdwg.mxu0
      %v486 = vmax.f32 %v424, 0.0
      %v487 = vmax.f32 %v427, 0.0
      %v488 = vmax.f32 %v432, 0.0
      %v489 = vmax.f32 %v435, 0.0
      %v490 = vmax.f32 %v440, 0.0
      %v491 = vmax.f32 %v443, 0.0
      %v492 = vmax.f32 %v448, 0.0
      %v493 = vmax.f32 %v451, 0.0
      %v494 = vmax.f32 %v456, 0.0
      %v495 = vmax.f32 %v459, 0.0
      %v496 = vmax.f32 %v464, 0.0
      %v497 = vmax.f32 %v467, 0.0
      %v498 = vmax.f32 %v472, 0.0
      %v499 = vmax.f32 %v475, 0.0
      %v500 = vmax.f32 %v480, 0.0
      %v501 = vmax.f32 %v483, 0.0
      %v502 = vpack.c.bf16 %v487, %v486
      %v503 = vpack.c.bf16 %v489, %v488
      %v504 = vpack.c.bf16 %v491, %v490
      %v505 = vpack.c.bf16 %v493, %v492
      %v506 = vpack.c.bf16 %v495, %v494
      %v507 = vpack.c.bf16 %v497, %v496
      %v508 = vpack.c.bf16 %v499, %v498
      %v509 = vpack.c.bf16 %v501, %v500
      %v510 = vld [vmem:[%s3] sm:$0xff]
      %v511 = vld [vmem:[%s3 + $0x8] sm:$0xff]
      %v512 = vld [vmem:[%s3 + $0x10] sm:$0xff]
      %v513 = vld [vmem:[%s3 + $0x18] sm:$0xff]
      %v514 = vld [vmem:[%s3 + $0x20] sm:$0xff]
      %v515 = vld [vmem:[%s3 + $0x28] sm:$0xff]
      %v516 = vld [vmem:[%s3 + $0x30] sm:$0xff]
      %v517 = vld [vmem:[%s3 + $0x38] sm:$0xff]
      %v518 = vld [vmem:[%s3 + $0x40] sm:$0xff]
      %v519 = vld [vmem:[%s3 + $0x48] sm:$0xff]
      %v520 = vld [vmem:[%s3 + $0x50] sm:$0xff]
      %v521 = vld [vmem:[%s3 + $0x58] sm:$0xff]
      %v522 = vld [vmem:[%s3 + $0x60] sm:$0xff]
      %v523 = vld [vmem:[%s3 + $0x68] sm:$0xff]
      %v524 = vld [vmem:[%s3 + $0x70] sm:$0xff]
      %v525 = vld [vmem:[%s3 + $0x78] sm:$0xff]
      %v526 = vld [vmem:[%s4] sm:$0x3]
      %v528 = vlaneseq
      %v529 = vshrl.u32 %v528, 7
      %v530 = vsub.s32 0, %v529
      %v531 = vrot.slane %v526, %v530
      %v532 = vlaneseq
      %v533 = vshrl.u32 %v532, 7
      %v534 = vsub.s32 1, %v533
      %v535 = vrot.slane %v526, %v534
      %v554 = vunpack.c.l.b16 %v510
      %v555 = vunpack.c.h.b16 %v510
      %v556 = vunpack.c.l.b16 %v511
      %v557 = vunpack.c.h.b16 %v511
      %v558 = vunpack.c.l.b16 %v512
      %v559 = vunpack.c.h.b16 %v512
      %v560 = vunpack.c.l.b16 %v513
      %v561 = vunpack.c.h.b16 %v513
      %v562 = vunpack.c.l.b16 %v514
      %v563 = vunpack.c.h.b16 %v514
      %v564 = vunpack.c.l.b16 %v515
      %v565 = vunpack.c.h.b16 %v515
      %v566 = vunpack.c.l.b16 %v516
      %v567 = vunpack.c.h.b16 %v516
      %v568 = vunpack.c.l.b16 %v517
      %v569 = vunpack.c.h.b16 %v517
      %v570 = vunpack.c.l.b16 %v518
      %v571 = vunpack.c.h.b16 %v518
      %v572 = vunpack.c.l.b16 %v519
      %v573 = vunpack.c.h.b16 %v519
      %v574 = vunpack.c.l.b16 %v520
      %v575 = vunpack.c.h.b16 %v520
      %v576 = vunpack.c.l.b16 %v521
      %v577 = vunpack.c.h.b16 %v521
      %v578 = vunpack.c.l.b16 %v522
      %v579 = vunpack.c.h.b16 %v522
      %v580 = vunpack.c.l.b16 %v523
      %v581 = vunpack.c.h.b16 %v523
      %v582 = vunpack.c.l.b16 %v524
      %v583 = vunpack.c.h.b16 %v524
      %v584 = vunpack.c.l.b16 %v525
      %v585 = vunpack.c.h.b16 %v525
      %v586 = vpack.c.b16 %v556, %v554
      %v587 = vpack.c.b16 %v557, %v555
      %v588 = vpack.c.b16 %v560, %v558
      %v589 = vpack.c.b16 %v561, %v559
      %v590 = vpack.c.b16 %v564, %v562
      %v591 = vpack.c.b16 %v565, %v563
      %v592 = vpack.c.b16 %v568, %v566
      %v593 = vpack.c.b16 %v569, %v567
      %v594 = vpack.c.b16 %v572, %v570
      %v595 = vpack.c.b16 %v573, %v571
      %v596 = vpack.c.b16 %v576, %v574
      %v597 = vpack.c.b16 %v577, %v575
      %v598 = vpack.c.b16 %v580, %v578
      %v599 = vpack.c.b16 %v581, %v579
      %v600 = vpack.c.b16 %v584, %v582
      %v601 = vpack.c.b16 %v585, %v583
      %618 = vmatprep.subr.bf16.mxu0 %v587
      %619 = vmatpush1.bf16.msra.mxu0 %v586
      %620 = vmatprep.subr.bf16.mxu0 %v589
      %621 = vmatpush1.bf16.msra.mxu0 %v588
      %622 = vmatprep.subr.bf16.mxu0 %v591
      %623 = vmatpush1.bf16.msra.mxu0 %v590
      %624 = vmatprep.subr.bf16.mxu0 %v593
      %625 = vmatpush1.bf16.msra.mxu0 %v592
      %626 = vmatprep.subr.bf16.mxu0 %v595
      %627 = vmatpush1.bf16.msra.mxu0 %v594
      %628 = vmatprep.subr.bf16.mxu0 %v597
      %629 = vmatpush1.bf16.msra.mxu0 %v596
      %630 = vmatprep.subr.bf16.mxu0 %v599
      %631 = vmatpush1.bf16.msra.mxu0 %v598
      %632 = vmatprep.subr.bf16.mxu0 %v601
      %633 = vmatpush1.bf16.msra.mxu0 %v600
      %634 = vmatprep.subr.bf16.mxu0 0
      %635 = vmatpush1.bf16.msra.mxu0 0
      %636 = vmatprep.subr.bf16.mxu0 0
      %637 = vmatpush1.bf16.msra.mxu0 0
      %638 = vmatprep.subr.bf16.mxu0 0
      %639 = vmatpush1.bf16.msra.mxu0 0
      %640 = vmatprep.subr.bf16.mxu0 0
      %641 = vmatpush1.bf16.msra.mxu0 0
      %642 = vmatprep.subr.bf16.mxu0 0
      %643 = vmatpush1.bf16.msra.mxu0 0
      %644 = vmatprep.subr.bf16.mxu0 0
      %645 = vmatpush1.bf16.msra.mxu0 0
      %646 = vmatprep.subr.bf16.mxu0 0
      %647 = vmatpush1.bf16.msra.mxu0 0
      %648 = vmatprep.subr.bf16.mxu0 0
      %649 = vmatpush1.bf16.msra.mxu0 0
      %650 = vmatprep.mubr.bf16.mxu0 0
      %651 = vmatmul.mubr.bf16.gmra.mrb[0].mxu0 %v502
      %v652 = vpop.f32.mrb[0].mxu0
      %v653 = vadd.f32 %v531, %v652
      %v654 = vpop.f32.mrb[0].mxu0
      %v655 = vadd.f32 %v535, %v654
      %v656 = vpop.f32.mrb[0].mxu0
      %v657 = vadd.f32 %v531, %v656
      %v658 = vpop.f32.mrb[0].mxu0
      %v659 = vadd.f32 %v535, %v658
      %660 = vmatprep.mubr.bf16.mxu0 0
      %661 = vmatmul.mubr.bf16.gmra.mrb[0].mxu0 %v503
      %v662 = vpop.f32.mrb[0].mxu0
      %v663 = vadd.f32 %v531, %v662
      %v664 = vpop.f32.mrb[0].mxu0
      %v665 = vadd.f32 %v535, %v664
      %v666 = vpop.f32.mrb[0].mxu0
      %v667 = vadd.f32 %v531, %v666
      %v668 = vpop.f32.mrb[0].mxu0
      %v669 = vadd.f32 %v535, %v668
      %670 = vmatprep.mubr.bf16.mxu0 0
      %671 = vmatmul.mubr.bf16.gmra.mrb[0].mxu0 %v504
      %v672 = vpop.f32.mrb[0].mxu0
      %v673 = vadd.f32 %v531, %v672
      %v674 = vpop.f32.mrb[0].mxu0
      %v675 = vadd.f32 %v535, %v674
      %v676 = vpop.f32.mrb[0].mxu0
      %v677 = vadd.f32 %v531, %v676
      %v678 = vpop.f32.mrb[0].mxu0
      %v679 = vadd.f32 %v535, %v678
      %680 = vmatprep.mubr.bf16.mxu0 0
      %681 = vmatmul.mubr.bf16.gmra.mrb[0].mxu0 %v505
      %v682 = vpop.f32.mrb[0].mxu0
      %v683 = vadd.f32 %v531, %v682
      %v684 = vpop.f32.mrb[0].mxu0
      %v685 = vadd.f32 %v535, %v684
      %v686 = vpop.f32.mrb[0].mxu0
      %v687 = vadd.f32 %v531, %v686
      %v688 = vpop.f32.mrb[0].mxu0
      %v689 = vadd.f32 %v535, %v688
      %690 = vmatprep.mubr.bf16.mxu0 0
      %691 = vmatmul.mubr.bf16.gmra.mrb[0].mxu0 %v506
      %v692 = vpop.f32.mrb[0].mxu0
      %v693 = vadd.f32 %v531, %v692
      %v694 = vpop.f32.mrb[0].mxu0
      %v695 = vadd.f32 %v535, %v694
      %v696 = vpop.f32.mrb[0].mxu0
      %v697 = vadd.f32 %v531, %v696
      %v698 = vpop.f32.mrb[0].mxu0
      %v699 = vadd.f32 %v535, %v698
      %700 = vmatprep.mubr.bf16.mxu0 0
      %701 = vmatmul.mubr.bf16.gmra.mrb[0].mxu0 %v507
      %v702 = vpop.f32.mrb[0].mxu0
      %v703 = vadd.f32 %v531, %v702
      %v704 = vpop.f32.mrb[0].mxu0
      %v705 = vadd.f32 %v535, %v704
      %v706 = vpop.f32.mrb[0].mxu0
      %v707 = vadd.f32 %v531, %v706
      %v708 = vpop.f32.mrb[0].mxu0
      %v709 = vadd.f32 %v535, %v708
      %710 = vmatprep.mubr.bf16.mxu0 0
      %711 = vmatmul.mubr.bf16.gmra.mrb[0].mxu0 %v508
      %v712 = vpop.f32.mrb[0].mxu0
      %v713 = vadd.f32 %v531, %v712
      %v714 = vpop.f32.mrb[0].mxu0
      %v715 = vadd.f32 %v535, %v714
      %v716 = vpop.f32.mrb[0].mxu0
      %v717 = vadd.f32 %v531, %v716
      %v718 = vpop.f32.mrb[0].mxu0
      %v719 = vadd.f32 %v535, %v718
      %720 = vmatprep.mubr.bf16.mxu0 0
      %721 = vmatmul.mubr.bf16.gmra.mrb[0].mxu0 %v509
      %v722 = vpop.f32.mrb[0].mxu0
      %v723 = vadd.f32 %v531, %v722
      %v724 = vpop.f32.mrb[0].mxu0
      %v725 = vadd.f32 %v535, %v724
      %v726 = vpop.f32.mrb[0].mxu0
      %v727 = vadd.f32 %v531, %v726
      %v728 = vpop.f32.mrb[0].mxu0
      %v729 = vadd.f32 %v535, %v728
      %730 = vdwg.mxu0
      %v731 = vmax.f32 %v653, 0.0
      %v732 = vmax.f32 %v655, 0.0
      %v733 = vmax.f32 %v657, 0.0
      %v734 = vmax.f32 %v659, 0.0
      %v735 = vmax.f32 %v663, 0.0
      %v736 = vmax.f32 %v665, 0.0
      %v737 = vmax.f32 %v667, 0.0
      %v738 = vmax.f32 %v669, 0.0
      %v739 = vmax.f32 %v673, 0.0
      %v740 = vmax.f32 %v675, 0.0
      %v741 = vmax.f32 %v677, 0.0
      %v742 = vmax.f32 %v679, 0.0
      %v743 = vmax.f32 %v683, 0.0
      %v744 = vmax.f32 %v685, 0.0
      %v745 = vmax.f32 %v687, 0.0
      %v746 = vmax.f32 %v689, 0.0
      %v747 = vmax.f32 %v693, 0.0
      %v748 = vmax.f32 %v695, 0.0
      %v749 = vmax.f32 %v697, 0.0
      %v750 = vmax.f32 %v699, 0.0
      %v751 = vmax.f32 %v703, 0.0
      %v752 = vmax.f32 %v705, 0.0
      %v753 = vmax.f32 %v707, 0.0
      %v754 = vmax.f32 %v709, 0.0
      %v755 = vmax.f32 %v713, 0.0
      %v756 = vmax.f32 %v715, 0.0
      %v757 = vmax.f32 %v717, 0.0
      %v758 = vmax.f32 %v719, 0.0
      %v759 = vmax.f32 %v723, 0.0
      %v760 = vmax.f32 %v725, 0.0
      %v761 = vmax.f32 %v727, 0.0
      %v762 = vmax.f32 %v729, 0.0
      %v763 = vpack.c.bf16 %v733, %v731
      %v764 = vpack.c.bf16 %v734, %v732
      %v765 = vpack.c.bf16 %v737, %v735
      %v766 = vpack.c.bf16 %v738, %v736
      %v767 = vpack.c.bf16 %v741, %v739
      %v768 = vpack.c.bf16 %v742, %v740
      %v769 = vpack.c.bf16 %v745, %v743
      %v770 = vpack.c.bf16 %v746, %v744
      %v771 = vpack.c.bf16 %v749, %v747
      %v772 = vpack.c.bf16 %v750, %v748
      %v773 = vpack.c.bf16 %v753, %v751
      %v774 = vpack.c.bf16 %v754, %v752
      %v775 = vpack.c.bf16 %v757, %v755
      %v776 = vpack.c.bf16 %v758, %v756
      %v777 = vpack.c.bf16 %v761, %v759
      %v778 = vpack.c.bf16 %v762, %v760
      %v779 = vld [vmem:[%s5] sm:$0xff]
      %v780 = vld [vmem:[%s5 + $0x8] sm:$0xff]
      %v781 = vld [vmem:[%s5 + $0x10] sm:$0xff]
      %v782 = vld [vmem:[%s5 + $0x18] sm:$0xf]
      %v783 = vld [vmem:[%s5 + $0x1c] sm:$0xff]
      %v784 = vld [vmem:[%s5 + $0x24] sm:$0xff]
      %v785 = vld [vmem:[%s5 + $0x2c] sm:$0xff]
      %v786 = vld [vmem:[%s5 + $0x34] sm:$0xf]
      %v787 = vld [vmem:[%s5 + $0x38] sm:$0xff]
      %v788 = vld [vmem:[%s5 + $0x40] sm:$0xff]
      %v789 = vld [vmem:[%s5 + $0x48] sm:$0xff]
      %v790 = vld [vmem:[%s5 + $0x50] sm:$0xf]
      %v791 = vld [vmem:[%s5 + $0x54] sm:$0xff]
      %v792 = vld [vmem:[%s5 + $0x5c] sm:$0xff]
      %v793 = vld [vmem:[%s5 + $0x64] sm:$0xff]
      %v794 = vld [vmem:[%s5 + $0x6c] sm:$0xf]
      %v795 = vld [vmem:[%s5 + $0x70] sm:$0xff]
      %v796 = vld [vmem:[%s5 + $0x78] sm:$0xff]
      %v797 = vld [vmem:[%s5 + $0x80] sm:$0xff]
      %v798 = vld [vmem:[%s5 + $0x88] sm:$0xf]
      %v799 = vld [vmem:[%s5 + $0x8c] sm:$0xff]
      %v800 = vld [vmem:[%s5 + $0x94] sm:$0xff]
      %v801 = vld [vmem:[%s5 + $0x9c] sm:$0xff]
      %v802 = vld [vmem:[%s5 + $0xa4] sm:$0xf]
      %v803 = vld [vmem:[%s5 + $0xa8] sm:$0xff]
      %v804 = vld [vmem:[%s5 + $0xb0] sm:$0xff]
      %v805 = vld [vmem:[%s5 + $0xb8] sm:$0xff]
      %v806 = vld [vmem:[%s5 + $0xc0] sm:$0xf]
      %v807 = vld [vmem:[%s5 + $0xc4] sm:$0xff]
      %v808 = vld [vmem:[%s5 + $0xcc] sm:$0xff]
      %v809 = vld [vmem:[%s5 + $0xd4] sm:$0xff]
      %v810 = vld [vmem:[%s5 + $0xdc] sm:$0xf]
      %v811 = vld [vmem:[%s5 + $0xe0] sm:$0xff]
      %v812 = vld [vmem:[%s5 + $0xe8] sm:$0xff]
      %v813 = vld [vmem:[%s5 + $0xf0] sm:$0xff]
      %v814 = vld [vmem:[%s5 + $0xf8] sm:$0xf]
      %v815 = vld [vmem:[%s5 + $0xfc] sm:$0xff]
      %v816 = vld [vmem:[%s5 + $0x104] sm:$0xff]
      %v817 = vld [vmem:[%s5 + $0x10c] sm:$0xff]
      %v818 = vld [vmem:[%s5 + $0x114] sm:$0xf]
      %v819 = vld [vmem:[%s5 + $0x118] sm:$0xff]
      %v820 = vld [vmem:[%s5 + $0x120] sm:$0xff]
      %v821 = vld [vmem:[%s5 + $0x128] sm:$0xff]
      %v822 = vld [vmem:[%s5 + $0x130] sm:$0xf]
      %v823 = vld [vmem:[%s5 + $0x134] sm:$0xff]
      %v824 = vld [vmem:[%s5 + $0x13c] sm:$0xff]
      %v825 = vld [vmem:[%s5 + $0x144] sm:$0xff]
      %v826 = vld [vmem:[%s5 + $0x14c] sm:$0xf]
      %v827 = vld [vmem:[%s5 + $0x150] sm:$0xff]
      %v828 = vld [vmem:[%s5 + $0x158] sm:$0xff]
      %v829 = vld [vmem:[%s5 + $0x160] sm:$0xff]
      %v830 = vld [vmem:[%s5 + $0x168] sm:$0xf]
      %v831 = vld [vmem:[%s5 + $0x16c] sm:$0xff]
      %v832 = vld [vmem:[%s5 + $0x174] sm:$0xff]
      %v833 = vld [vmem:[%s5 + $0x17c] sm:$0xff]
      %v834 = vld [vmem:[%s5 + $0x184] sm:$0xf]
      %v835 = vld [vmem:[%s5 + $0x188] sm:$0xff]
      %v836 = vld [vmem:[%s5 + $0x190] sm:$0xff]
      %v837 = vld [vmem:[%s5 + $0x198] sm:$0xff]
      %v838 = vld [vmem:[%s5 + $0x1a0] sm:$0xf]
      %v839 = vld [vmem:[%s5 + $0x1a4] sm:$0xff]
      %v840 = vld [vmem:[%s5 + $0x1ac] sm:$0xff]
      %v841 = vld [vmem:[%s5 + $0x1b4] sm:$0xff]
      %v842 = vld [vmem:[%s5 + $0x1bc] sm:$0xf]
      %v843 = vld [vmem:[%s5 + $0x1c0] sm:$0xff]
      %v844 = vld [vmem:[%s5 + $0x1c8] sm:$0xff]
      %v845 = vld [vmem:[%s5 + $0x1d0] sm:$0xff]
      %v846 = vld [vmem:[%s5 + $0x1d8] sm:$0xf]
      %v847 = vld [vmem:[%s5 + $0x1dc] sm:$0xff]
      %v848 = vld [vmem:[%s5 + $0x1e4] sm:$0xff]
      %v849 = vld [vmem:[%s5 + $0x1ec] sm:$0xff]
      %v850 = vld [vmem:[%s5 + $0x1f4] sm:$0xf]
      %v851 = vld [vmem:[%s5 + $0x1f8] sm:$0xff]
      %v852 = vld [vmem:[%s5 + $0x200] sm:$0xff]
      %v853 = vld [vmem:[%s5 + $0x208] sm:$0xff]
      %v854 = vld [vmem:[%s5 + $0x210] sm:$0xf]
      %v855 = vld [vmem:[%s5 + $0x214] sm:$0xff]
      %v856 = vld [vmem:[%s5 + $0x21c] sm:$0xff]
      %v857 = vld [vmem:[%s5 + $0x224] sm:$0xff]
      %v858 = vld [vmem:[%s5 + $0x22c] sm:$0xf]
      %v859 = vld [vmem:[%s5 + $0x230] sm:$0xff]
      %v860 = vld [vmem:[%s5 + $0x238] sm:$0xff]
      %v861 = vld [vmem:[%s5 + $0x240] sm:$0xff]
      %v862 = vld [vmem:[%s5 + $0x248] sm:$0xf]
      %v863 = vld [vmem:[%s5 + $0x24c] sm:$0xff]
      %v864 = vld [vmem:[%s5 + $0x254] sm:$0xff]
      %v865 = vld [vmem:[%s5 + $0x25c] sm:$0xff]
      %v866 = vld [vmem:[%s5 + $0x264] sm:$0xf]
      %v867 = vld [vmem:[%s5 + $0x268] sm:$0xff]
      %v868 = vld [vmem:[%s5 + $0x270] sm:$0xff]
      %v869 = vld [vmem:[%s5 + $0x278] sm:$0xff]
      %v870 = vld [vmem:[%s5 + $0x280] sm:$0xf]
      %v871 = vld [vmem:[%s5 + $0x284] sm:$0xff]
      %v872 = vld [vmem:[%s5 + $0x28c] sm:$0xff]
      %v873 = vld [vmem:[%s5 + $0x294] sm:$0xff]
      %v874 = vld [vmem:[%s5 + $0x29c] sm:$0xf]
      %v875 = vld [vmem:[%s5 + $0x2a0] sm:$0xff]
      %v876 = vld [vmem:[%s5 + $0x2a8] sm:$0xff]
      %v877 = vld [vmem:[%s5 + $0x2b0] sm:$0xff]
      %v878 = vld [vmem:[%s5 + $0x2b8] sm:$0xf]
      %v879 = vld [vmem:[%s5 + $0x2bc] sm:$0xff]
      %v880 = vld [vmem:[%s5 + $0x2c4] sm:$0xff]
      %v881 = vld [vmem:[%s5 + $0x2cc] sm:$0xff]
      %v882 = vld [vmem:[%s5 + $0x2d4] sm:$0xf]
      %v883 = vld [vmem:[%s5 + $0x2d8] sm:$0xff]
      %v884 = vld [vmem:[%s5 + $0x2e0] sm:$0xff]
      %v885 = vld [vmem:[%s5 + $0x2e8] sm:$0xff]
      %v886 = vld [vmem:[%s5 + $0x2f0] sm:$0xf]
      %v887 = vld [vmem:[%s5 + $0x2f4] sm:$0xff]
      %v888 = vld [vmem:[%s5 + $0x2fc] sm:$0xff]
      %v889 = vld [vmem:[%s5 + $0x304] sm:$0xff]
      %v890 = vld [vmem:[%s5 + $0x30c] sm:$0xf]
      %v891 = vld [vmem:[%s5 + $0x310] sm:$0xff]
      %v892 = vld [vmem:[%s5 + $0x318] sm:$0xff]
      %v893 = vld [vmem:[%s5 + $0x320] sm:$0xff]
      %v894 = vld [vmem:[%s5 + $0x328] sm:$0xf]
      %v895 = vld [vmem:[%s5 + $0x32c] sm:$0xff]
      %v896 = vld [vmem:[%s5 + $0x334] sm:$0xff]
      %v897 = vld [vmem:[%s5 + $0x33c] sm:$0xff]
      %v898 = vld [vmem:[%s5 + $0x344] sm:$0xf]
      %v899 = vld [vmem:[%s5 + $0x348] sm:$0xff]
      %v900 = vld [vmem:[%s5 + $0x350] sm:$0xff]
      %v901 = vld [vmem:[%s5 + $0x358] sm:$0xff]
      %v902 = vld [vmem:[%s5 + $0x360] sm:$0xf]
      %v903 = vld [vmem:[%s5 + $0x364] sm:$0xff]
      %v904 = vld [vmem:[%s5 + $0x36c] sm:$0xff]
      %v905 = vld [vmem:[%s5 + $0x374] sm:$0xff]
      %v906 = vld [vmem:[%s5 + $0x37c] sm:$0xf]
      %v907 = vld [vmem:[%s6] sm:$0x7f]
      %v909 = vlaneseq
      %v910 = vshrl.u32 %v909, 7
      %v911 = vsub.s32 0, %v910
      %v912 = vrot.slane %v907, %v911
      %v913 = vlaneseq
      %v914 = vshrl.u32 %v913, 7
      %v915 = vsub.s32 1, %v914
      %v916 = vrot.slane %v907, %v915
      %v917 = vlaneseq
      %v918 = vshrl.u32 %v917, 7
      %v919 = vsub.s32 2, %v918
      %v920 = vrot.slane %v907, %v919
      %v921 = vlaneseq
      %v922 = vshrl.u32 %v921, 7
      %v923 = vsub.s32 3, %v922
      %v924 = vrot.slane %v907, %v923
      %v925 = vlaneseq
      %v926 = vshrl.u32 %v925, 7
      %v927 = vsub.s32 4, %v926
      %v928 = vrot.slane %v907, %v927
      %v929 = vlaneseq
      %v930 = vshrl.u32 %v929, 7
      %v931 = vsub.s32 5, %v930
      %v932 = vrot.slane %v907, %v931
      %v933 = vlaneseq
      %v934 = vshrl.u32 %v933, 7
      %v935 = vsub.s32 6, %v934
      %v936 = vrot.slane %v907, %v935
      %v1072 = vunpack.c.l.b16 %v779
      %v1073 = vunpack.c.h.b16 %v779
      %v1074 = vunpack.c.l.b16 %v780
      %v1075 = vunpack.c.h.b16 %v780
      %v1076 = vunpack.c.l.b16 %v781
      %v1077 = vunpack.c.h.b16 %v781
      %v1078 = vunpack.c.l.b16 %v782
      %v1079 = vunpack.c.l.b16 %v783
      %v1080 = vunpack.c.h.b16 %v783
      %v1081 = vunpack.c.l.b16 %v784
      %v1082 = vunpack.c.h.b16 %v784
      %v1083 = vunpack.c.l.b16 %v785
      %v1084 = vunpack.c.h.b16 %v785
      %v1085 = vunpack.c.l.b16 %v786
      %v1086 = vunpack.c.l.b16 %v787
      %v1087 = vunpack.c.h.b16 %v787
      %v1088 = vunpack.c.l.b16 %v788
      %v1089 = vunpack.c.h.b16 %v788
      %v1090 = vunpack.c.l.b16 %v789
      %v1091 = vunpack.c.h.b16 %v789
      %v1092 = vunpack.c.l.b16 %v790
      %v1093 = vunpack.c.l.b16 %v791
      %v1094 = vunpack.c.h.b16 %v791
      %v1095 = vunpack.c.l.b16 %v792
      %v1096 = vunpack.c.h.b16 %v792
      %v1097 = vunpack.c.l.b16 %v793
      %v1098 = vunpack.c.h.b16 %v793
      %v1099 = vunpack.c.l.b16 %v794
      %v1100 = vunpack.c.l.b16 %v795
      %v1101 = vunpack.c.h.b16 %v795
      %v1102 = vunpack.c.l.b16 %v796
      %v1103 = vunpack.c.h.b16 %v796
      %v1104 = vunpack.c.l.b16 %v797
      %v1105 = vunpack.c.h.b16 %v797
      %v1106 = vunpack.c.l.b16 %v798
      %v1107 = vunpack.c.l.b16 %v799
      %v1108 = vunpack.c.h.b16 %v799
      %v1109 = vunpack.c.l.b16 %v800
      %v1110 = vunpack.c.h.b16 %v800
      %v1111 = vunpack.c.l.b16 %v801
      %v1112 = vunpack.c.h.b16 %v801
      %v1113 = vunpack.c.l.b16 %v802
      %v1114 = vunpack.c.l.b16 %v803
      %v1115 = vunpack.c.h.b16 %v803
      %v1116 = vunpack.c.l.b16 %v804
      %v1117 = vunpack.c.h.b16 %v804
      %v1118 = vunpack.c.l.b16 %v805
      %v1119 = vunpack.c.h.b16 %v805
      %v1120 = vunpack.c.l.b16 %v806
      %v1121 = vunpack.c.l.b16 %v807
      %v1122 = vunpack.c.h.b16 %v807
      %v1123 = vunpack.c.l.b16 %v808
      %v1124 = vunpack.c.h.b16 %v808
      %v1125 = vunpack.c.l.b16 %v809
      %v1126 = vunpack.c.h.b16 %v809
      %v1127 = vunpack.c.l.b16 %v810
      %v1128 = vunpack.c.l.b16 %v811
      %v1129 = vunpack.c.h.b16 %v811
      %v1130 = vunpack.c.l.b16 %v812
      %v1131 = vunpack.c.h.b16 %v812
      %v1132 = vunpack.c.l.b16 %v813
      %v1133 = vunpack.c.h.b16 %v813
      %v1134 = vunpack.c.l.b16 %v814
      %v1135 = vunpack.c.l.b16 %v815
      %v1136 = vunpack.c.h.b16 %v815
      %v1137 = vunpack.c.l.b16 %v816
      %v1138 = vunpack.c.h.b16 %v816
      %v1139 = vunpack.c.l.b16 %v817
      %v1140 = vunpack.c.h.b16 %v817
      %v1141 = vunpack.c.l.b16 %v818
      %v1142 = vunpack.c.l.b16 %v819
      %v1143 = vunpack.c.h.b16 %v819
      %v1144 = vunpack.c.l.b16 %v820
      %v1145 = vunpack.c.h.b16 %v820
      %v1146 = vunpack.c.l.b16 %v821
      %v1147 = vunpack.c.h.b16 %v821
      %v1148 = vunpack.c.l.b16 %v822
      %v1149 = vunpack.c.l.b16 %v823
      %v1150 = vunpack.c.h.b16 %v823
      %v1151 = vunpack.c.l.b16 %v824
      %v1152 = vunpack.c.h.b16 %v824
      %v1153 = vunpack.c.l.b16 %v825
      %v1154 = vunpack.c.h.b16 %v825
      %v1155 = vunpack.c.l.b16 %v826
      %v1156 = vunpack.c.l.b16 %v827
      %v1157 = vunpack.c.h.b16 %v827
      %v1158 = vunpack.c.l.b16 %v828
      %v1159 = vunpack.c.h.b16 %v828
      %v1160 = vunpack.c.l.b16 %v829
      %v1161 = vunpack.c.h.b16 %v829
      %v1162 = vunpack.c.l.b16 %v830
      %v1163 = vunpack.c.l.b16 %v831
      %v1164 = vunpack.c.h.b16 %v831
      %v1165 = vunpack.c.l.b16 %v832
      %v1166 = vunpack.c.h.b16 %v832
      %v1167 = vunpack.c.l.b16 %v833
      %v1168 = vunpack.c.h.b16 %v833
      %v1169 = vunpack.c.l.b16 %v834
      %v1170 = vunpack.c.l.b16 %v835
      %v1171 = vunpack.c.h.b16 %v835
      %v1172 = vunpack.c.l.b16 %v836
      %v1173 = vunpack.c.h.b16 %v836
      %v1174 = vunpack.c.l.b16 %v837
      %v1175 = vunpack.c.h.b16 %v837
      %v1176 = vunpack.c.l.b16 %v838
      %v1177 = vunpack.c.l.b16 %v839
      %v1178 = vunpack.c.h.b16 %v839
      %v1179 = vunpack.c.l.b16 %v840
      %v1180 = vunpack.c.h.b16 %v840
      %v1181 = vunpack.c.l.b16 %v841
      %v1182 = vunpack.c.h.b16 %v841
      %v1183 = vunpack.c.l.b16 %v842
      %v1184 = vunpack.c.l.b16 %v843
      %v1185 = vunpack.c.h.b16 %v843
      %v1186 = vunpack.c.l.b16 %v844
      %v1187 = vunpack.c.h.b16 %v844
      %v1188 = vunpack.c.l.b16 %v845
      %v1189 = vunpack.c.h.b16 %v845
      %v1190 = vunpack.c.l.b16 %v846
      %v1191 = vunpack.c.l.b16 %v847
      %v1192 = vunpack.c.h.b16 %v847
      %v1193 = vunpack.c.l.b16 %v848
      %v1194 = vunpack.c.h.b16 %v848
      %v1195 = vunpack.c.l.b16 %v849
      %v1196 = vunpack.c.h.b16 %v849
      %v1197 = vunpack.c.l.b16 %v850
      %v1198 = vunpack.c.l.b16 %v851
      %v1199 = vunpack.c.h.b16 %v851
      %v1200 = vunpack.c.l.b16 %v852
      %v1201 = vunpack.c.h.b16 %v852
      %v1202 = vunpack.c.l.b16 %v853
      %v1203 = vunpack.c.h.b16 %v853
      %v1204 = vunpack.c.l.b16 %v854
      %v1205 = vunpack.c.l.b16 %v855
      %v1206 = vunpack.c.h.b16 %v855
      %v1207 = vunpack.c.l.b16 %v856
      %v1208 = vunpack.c.h.b16 %v856
      %v1209 = vunpack.c.l.b16 %v857
      %v1210 = vunpack.c.h.b16 %v857
      %v1211 = vunpack.c.l.b16 %v858
      %v1212 = vunpack.c.l.b16 %v859
      %v1213 = vunpack.c.h.b16 %v859
      %v1214 = vunpack.c.l.b16 %v860
      %v1215 = vunpack.c.h.b16 %v860
      %v1216 = vunpack.c.l.b16 %v861
      %v1217 = vunpack.c.h.b16 %v861
      %v1218 = vunpack.c.l.b16 %v862
      %v1219 = vunpack.c.l.b16 %v863
      %v1220 = vunpack.c.h.b16 %v863
      %v1221 = vunpack.c.l.b16 %v864
      %v1222 = vunpack.c.h.b16 %v864
      %v1223 = vunpack.c.l.b16 %v865
      %v1224 = vunpack.c.h.b16 %v865
      %v1225 = vunpack.c.l.b16 %v866
      %v1226 = vunpack.c.l.b16 %v867
      %v1227 = vunpack.c.h.b16 %v867
      %v1228 = vunpack.c.l.b16 %v868
      %v1229 = vunpack.c.h.b16 %v868
      %v1230 = vunpack.c.l.b16 %v869
      %v1231 = vunpack.c.h.b16 %v869
      %v1232 = vunpack.c.l.b16 %v870
      %v1233 = vunpack.c.l.b16 %v871
      %v1234 = vunpack.c.h.b16 %v871
      %v1235 = vunpack.c.l.b16 %v872
      %v1236 = vunpack.c.h.b16 %v872
      %v1237 = vunpack.c.l.b16 %v873
      %v1238 = vunpack.c.h.b16 %v873
      %v1239 = vunpack.c.l.b16 %v874
      %v1240 = vunpack.c.l.b16 %v875
      %v1241 = vunpack.c.h.b16 %v875
      %v1242 = vunpack.c.l.b16 %v876
      %v1243 = vunpack.c.h.b16 %v876
      %v1244 = vunpack.c.l.b16 %v877
      %v1245 = vunpack.c.h.b16 %v877
      %v1246 = vunpack.c.l.b16 %v878
      %v1247 = vunpack.c.l.b16 %v879
      %v1248 = vunpack.c.h.b16 %v879
      %v1249 = vunpack.c.l.b16 %v880
      %v1250 = vunpack.c.h.b16 %v880
      %v1251 = vunpack.c.l.b16 %v881
      %v1252 = vunpack.c.h.b16 %v881
      %v1253 = vunpack.c.l.b16 %v882
      %v1254 = vunpack.c.l.b16 %v883
      %v1255 = vunpack.c.h.b16 %v883
      %v1256 = vunpack.c.l.b16 %v884
      %v1257 = vunpack.c.h.b16 %v884
      %v1258 = vunpack.c.l.b16 %v885
      %v1259 = vunpack.c.h.b16 %v885
      %v1260 = vunpack.c.l.b16 %v886
      %v1261 = vunpack.c.l.b16 %v887
      %v1262 = vunpack.c.h.b16 %v887
      %v1263 = vunpack.c.l.b16 %v888
      %v1264 = vunpack.c.h.b16 %v888
      %v1265 = vunpack.c.l.b16 %v889
      %v1266 = vunpack.c.h.b16 %v889
      %v1267 = vunpack.c.l.b16 %v890
      %v1268 = vunpack.c.l.b16 %v891
      %v1269 = vunpack.c.h.b16 %v891
      %v1270 = vunpack.c.l.b16 %v892
      %v1271 = vunpack.c.h.b16 %v892
      %v1272 = vunpack.c.l.b16 %v893
      %v1273 = vunpack.c.h.b16 %v893
      %v1274 = vunpack.c.l.b16 %v894
      %v1275 = vunpack.c.l.b16 %v895
      %v1276 = vunpack.c.h.b16 %v895
      %v1277 = vunpack.c.l.b16 %v896
      %v1278 = vunpack.c.h.b16 %v896
      %v1279 = vunpack.c.l.b16 %v897
      %v1280 = vunpack.c.h.b16 %v897
      %v1281 = vunpack.c.l.b16 %v898
      %v1282 = vunpack.c.l.b16 %v899
      %v1283 = vunpack.c.h.b16 %v899
      %v1284 = vunpack.c.l.b16 %v900
      %v1285 = vunpack.c.h.b16 %v900
      %v1286 = vunpack.c.l.b16 %v901
      %v1287 = vunpack.c.h.b16 %v901
      %v1288 = vunpack.c.l.b16 %v902
      %v1289 = vunpack.c.l.b16 %v903
      %v1290 = vunpack.c.h.b16 %v903
      %v1291 = vunpack.c.l.b16 %v904
      %v1292 = vunpack.c.h.b16 %v904
      %v1293 = vunpack.c.l.b16 %v905
      %v1294 = vunpack.c.h.b16 %v905
      %v1295 = vunpack.c.l.b16 %v906
      %v1296 = vpack.c.b16 %v1079, %v1072
      %v1297 = vpack.c.b16 %v1080, %v1073
      %v1298 = vpack.c.b16 %v1081, %v1074
      %v1299 = vpack.c.b16 %v1082, %v1075
      %v1300 = vpack.c.b16 %v1083, %v1076
      %v1301 = vpack.c.b16 %v1084, %v1077
      %v1302 = vpack.c.b16 %v1085, %v1078
      %v1303 = vpack.c.b16 %v1093, %v1086
      %v1304 = vpack.c.b16 %v1094, %v1087
      %v1305 = vpack.c.b16 %v1095, %v1088
      %v1306 = vpack.c.b16 %v1096, %v1089
      %v1307 = vpack.c.b16 %v1097, %v1090
      %v1308 = vpack.c.b16 %v1098, %v1091
      %v1309 = vpack.c.b16 %v1099, %v1092
      %v1310 = vpack.c.b16 %v1107, %v1100
      %v1311 = vpack.c.b16 %v1108, %v1101
      %v1312 = vpack.c.b16 %v1109, %v1102
      %v1313 = vpack.c.b16 %v1110, %v1103
      %v1314 = vpack.c.b16 %v1111, %v1104
      %v1315 = vpack.c.b16 %v1112, %v1105
      %v1316 = vpack.c.b16 %v1113, %v1106
      %v1317 = vpack.c.b16 %v1121, %v1114
      %v1318 = vpack.c.b16 %v1122, %v1115
      %v1319 = vpack.c.b16 %v1123, %v1116
      %v1320 = vpack.c.b16 %v1124, %v1117
      %v1321 = vpack.c.b16 %v1125, %v1118
      %v1322 = vpack.c.b16 %v1126, %v1119
      %v1323 = vpack.c.b16 %v1127, %v1120
      %v1324 = vpack.c.b16 %v1135, %v1128
      %v1325 = vpack.c.b16 %v1136, %v1129
      %v1326 = vpack.c.b16 %v1137, %v1130
      %v1327 = vpack.c.b16 %v1138, %v1131
      %v1328 = vpack.c.b16 %v1139, %v1132
      %v1329 = vpack.c.b16 %v1140, %v1133
      %v1330 = vpack.c.b16 %v1141, %v1134
      %v1331 = vpack.c.b16 %v1149, %v1142
      %v1332 = vpack.c.b16 %v1150, %v1143
      %v1333 = vpack.c.b16 %v1151, %v1144
      %v1334 = vpack.c.b16 %v1152, %v1145
      %v1335 = vpack.c.b16 %v1153, %v1146
      %v1336 = vpack.c.b16 %v1154, %v1147
      %v1337 = vpack.c.b16 %v1155, %v1148
      %v1338 = vpack.c.b16 %v1163, %v1156
      %v1339 = vpack.c.b16 %v1164, %v1157
      %v1340 = vpack.c.b16 %v1165, %v1158
      %v1341 = vpack.c.b16 %v1166, %v1159
      %v1342 = vpack.c.b16 %v1167, %v1160
      %v1343 = vpack.c.b16 %v1168, %v1161
      %v1344 = vpack.c.b16 %v1169, %v1162
      %v1345 = vpack.c.b16 %v1177, %v1170
      %v1346 = vpack.c.b16 %v1178, %v1171
      %v1347 = vpack.c.b16 %v1179, %v1172
      %v1348 = vpack.c.b16 %v1180, %v1173
      %v1349 = vpack.c.b16 %v1181, %v1174
      %v1350 = vpack.c.b16 %v1182, %v1175
      %v1351 = vpack.c.b16 %v1183, %v1176
      %v1352 = vpack.c.b16 %v1191, %v1184
      %v1353 = vpack.c.b16 %v1192, %v1185
      %v1354 = vpack.c.b16 %v1193, %v1186
      %v1355 = vpack.c.b16 %v1194, %v1187
      %v1356 = vpack.c.b16 %v1195, %v1188
      %v1357 = vpack.c.b16 %v1196, %v1189
      %v1358 = vpack.c.b16 %v1197, %v1190
      %v1359 = vpack.c.b16 %v1205, %v1198
      %v1360 = vpack.c.b16 %v1206, %v1199
      %v1361 = vpack.c.b16 %v1207, %v1200
      %v1362 = vpack.c.b16 %v1208, %v1201
      %v1363 = vpack.c.b16 %v1209, %v1202
      %v1364 = vpack.c.b16 %v1210, %v1203
      %v1365 = vpack.c.b16 %v1211, %v1204
      %v1366 = vpack.c.b16 %v1219, %v1212
      %v1367 = vpack.c.b16 %v1220, %v1213
      %v1368 = vpack.c.b16 %v1221, %v1214
      %v1369 = vpack.c.b16 %v1222, %v1215
      %v1370 = vpack.c.b16 %v1223, %v1216
      %v1371 = vpack.c.b16 %v1224, %v1217
      %v1372 = vpack.c.b16 %v1225, %v1218
      %v1373 = vpack.c.b16 %v1233, %v1226
      %v1374 = vpack.c.b16 %v1234, %v1227
      %v1375 = vpack.c.b16 %v1235, %v1228
      %v1376 = vpack.c.b16 %v1236, %v1229
      %v1377 = vpack.c.b16 %v1237, %v1230
      %v1378 = vpack.c.b16 %v1238, %v1231
      %v1379 = vpack.c.b16 %v1239, %v1232
      %v1380 = vpack.c.b16 %v1247, %v1240
      %v1381 = vpack.c.b16 %v1248, %v1241
      %v1382 = vpack.c.b16 %v1249, %v1242
      %v1383 = vpack.c.b16 %v1250, %v1243
      %v1384 = vpack.c.b16 %v1251, %v1244
      %v1385 = vpack.c.b16 %v1252, %v1245
      %v1386 = vpack.c.b16 %v1253, %v1246
      %v1387 = vpack.c.b16 %v1261, %v1254
      %v1388 = vpack.c.b16 %v1262, %v1255
      %v1389 = vpack.c.b16 %v1263, %v1256
      %v1390 = vpack.c.b16 %v1264, %v1257
      %v1391 = vpack.c.b16 %v1265, %v1258
      %v1392 = vpack.c.b16 %v1266, %v1259
      %v1393 = vpack.c.b16 %v1267, %v1260
      %v1394 = vpack.c.b16 %v1275, %v1268
      %v1395 = vpack.c.b16 %v1276, %v1269
      %v1396 = vpack.c.b16 %v1277, %v1270
      %v1397 = vpack.c.b16 %v1278, %v1271
      %v1398 = vpack.c.b16 %v1279, %v1272
      %v1399 = vpack.c.b16 %v1280, %v1273
      %v1400 = vpack.c.b16 %v1281, %v1274
      %v1401 = vpack.c.b16 %v1289, %v1282
      %v1402 = vpack.c.b16 %v1290, %v1283
      %v1403 = vpack.c.b16 %v1291, %v1284
      %v1404 = vpack.c.b16 %v1292, %v1285
      %v1405 = vpack.c.b16 %v1293, %v1286
      %v1406 = vpack.c.b16 %v1294, %v1287
      %v1407 = vpack.c.b16 %v1295, %v1288
      %1520 = vmatprep.subr.bf16.mxu0 %v1297
      %1521 = vmatpush1.bf16.msra.mxu0 %v1296
      %1522 = vmatprep.subr.bf16.mxu0 %v1304
      %1523 = vmatpush1.bf16.msra.mxu0 %v1303
      %1524 = vmatprep.subr.bf16.mxu0 %v1311
      %1525 = vmatpush1.bf16.msra.mxu0 %v1310
      %1526 = vmatprep.subr.bf16.mxu0 %v1318
      %1527 = vmatpush1.bf16.msra.mxu0 %v1317
      %1528 = vmatprep.subr.bf16.mxu0 %v1325
      %1529 = vmatpush1.bf16.msra.mxu0 %v1324
      %1530 = vmatprep.subr.bf16.mxu0 %v1332
      %1531 = vmatpush1.bf16.msra.mxu0 %v1331
      %1532 = vmatprep.subr.bf16.mxu0 %v1339
      %1533 = vmatpush1.bf16.msra.mxu0 %v1338
      %1534 = vmatprep.subr.bf16.mxu0 %v1346
      %1535 = vmatpush1.bf16.msra.mxu0 %v1345
      %1536 = vmatprep.subr.bf16.mxu0 %v1353
      %1537 = vmatpush1.bf16.msra.mxu0 %v1352
      %1538 = vmatprep.subr.bf16.mxu0 %v1360
      %1539 = vmatpush1.bf16.msra.mxu0 %v1359
      %1540 = vmatprep.subr.bf16.mxu0 %v1367
      %1541 = vmatpush1.bf16.msra.mxu0 %v1366
      %1542 = vmatprep.subr.bf16.mxu0 %v1374
      %1543 = vmatpush1.bf16.msra.mxu0 %v1373
      %1544 = vmatprep.subr.bf16.mxu0 %v1381
      %1545 = vmatpush1.bf16.msra.mxu0 %v1380
      %1546 = vmatprep.subr.bf16.mxu0 %v1388
      %1547 = vmatpush1.bf16.msra.mxu0 %v1387
      %1548 = vmatprep.subr.bf16.mxu0 %v1395
      %1549 = vmatpush1.bf16.msra.mxu0 %v1394
      %1550 = vmatprep.subr.bf16.mxu0 %v1402
      %1551 = vmatpush1.bf16.msra.mxu0 %v1401
      %1552 = vmatprep.mubr.bf16.mxu0 %v764
      %1553 = vmatmul.mubr.bf16.gmra.mrb[0].mxu0 %v763
      %v1554 = vpop.f32.mrb[0].mxu0
      %v1555 = vadd.f32 %v912, %v1554
      %v1556 = vpop.f32.mrb[0].mxu0
      %v1557 = vadd.f32 %v916, %v1556
      %v1558 = vpop.f32.mrb[0].mxu0
      %v1559 = vadd.f32 %v912, %v1558
      %v1560 = vpop.f32.mrb[0].mxu0
      %v1561 = vadd.f32 %v916, %v1560
      %1562 = vmatprep.mubr.bf16.mxu0 %v766
      %1563 = vmatmul.mubr.bf16.gmra.mrb[0].mxu0 %v765
      %v1564 = vpop.f32.mrb[0].mxu0
      %v1565 = vadd.f32 %v912, %v1564
      %v1566 = vpop.f32.mrb[0].mxu0
      %v1567 = vadd.f32 %v916, %v1566
      %v1568 = vpop.f32.mrb[0].mxu0
      %v1569 = vadd.f32 %v912, %v1568
      %v1570 = vpop.f32.mrb[0].mxu0
      %v1571 = vadd.f32 %v916, %v1570
      %1572 = vmatprep.mubr.bf16.mxu0 %v768
      %1573 = vmatmul.mubr.bf16.gmra.mrb[0].mxu0 %v767
      %v1574 = vpop.f32.mrb[0].mxu0
      %v1575 = vadd.f32 %v912, %v1574
      %v1576 = vpop.f32.mrb[0].mxu0
      %v1577 = vadd.f32 %v916, %v1576
      %v1578 = vpop.f32.mrb[0].mxu0
      %v1579 = vadd.f32 %v912, %v1578
      %v1580 = vpop.f32.mrb[0].mxu0
      %v1581 = vadd.f32 %v916, %v1580
      %1582 = vmatprep.mubr.bf16.mxu0 %v770
      %1583 = vmatmul.mubr.bf16.gmra.mrb[0].mxu0 %v769
      %v1584 = vpop.f32.mrb[0].mxu0
      %v1585 = vadd.f32 %v912, %v1584
      %v1586 = vpop.f32.mrb[0].mxu0
      %v1587 = vadd.f32 %v916, %v1586
      %v1588 = vpop.f32.mrb[0].mxu0
      %v1589 = vadd.f32 %v912, %v1588
      %v1590 = vpop.f32.mrb[0].mxu0
      %v1591 = vadd.f32 %v916, %v1590
      %1592 = vmatprep.mubr.bf16.mxu0 %v772
      %1593 = vmatmul.mubr.bf16.gmra.mrb[0].mxu0 %v771
      %v1594 = vpop.f32.mrb[0].mxu0
      %v1595 = vadd.f32 %v912, %v1594
      %v1596 = vpop.f32.mrb[0].mxu0
      %v1597 = vadd.f32 %v916, %v1596
      %v1598 = vpop.f32.mrb[0].mxu0
      %v1599 = vadd.f32 %v912, %v1598
      %v1600 = vpop.f32.mrb[0].mxu0
      %v1601 = vadd.f32 %v916, %v1600
      %1602 = vmatprep.mubr.bf16.mxu0 %v774
      %1603 = vmatmul.mubr.bf16.gmra.mrb[0].mxu0 %v773
      %v1604 = vpop.f32.mrb[0].mxu0
      %v1605 = vadd.f32 %v912, %v1604
      %v1606 = vpop.f32.mrb[0].mxu0
      %v1607 = vadd.f32 %v916, %v1606
      %v1608 = vpop.f32.mrb[0].mxu0
      %v1609 = vadd.f32 %v912, %v1608
      %v1610 = vpop.f32.mrb[0].mxu0
      %v1611 = vadd.f32 %v916, %v1610
      %1612 = vmatprep.mubr.bf16.mxu0 %v776
      %1613 = vmatmul.mubr.bf16.gmra.mrb[0].mxu0 %v775
      %v1614 = vpop.f32.mrb[0].mxu0
      %v1615 = vadd.f32 %v912, %v1614
      %v1616 = vpop.f32.mrb[0].mxu0
      %v1617 = vadd.f32 %v916, %v1616
      %v1618 = vpop.f32.mrb[0].mxu0
      %v1619 = vadd.f32 %v912, %v1618
      %v1620 = vpop.f32.mrb[0].mxu0
      %v1621 = vadd.f32 %v916, %v1620
      %1622 = vmatprep.mubr.bf16.mxu0 %v778
      %1623 = vmatmul.mubr.bf16.gmra.mrb[0].mxu0 %v777
      %v1624 = vpop.f32.mrb[0].mxu0
      %v1625 = vadd.f32 %v912, %v1624
      %v1626 = vpop.f32.mrb[0].mxu0
      %v1627 = vadd.f32 %v916, %v1626
      %v1628 = vpop.f32.mrb[0].mxu0
      %v1629 = vadd.f32 %v912, %v1628
      %v1630 = vpop.f32.mrb[0].mxu0
      %v1631 = vadd.f32 %v916, %v1630
      %1632 = vdwg.mxu0
      %1633 = vmatprep.subr.bf16.mxu0 %v1299
      %1634 = vmatpush1.bf16.msra.mxu0 %v1298
      %1635 = vmatprep.subr.bf16.mxu0 %v1306
      %1636 = vmatpush1.bf16.msra.mxu0 %v1305
      %1637 = vmatprep.subr.bf16.mxu0 %v1313
      %1638 = vmatpush1.bf16.msra.mxu0 %v1312
      %1639 = vmatprep.subr.bf16.mxu0 %v1320
      %1640 = vmatpush1.bf16.msra.mxu0 %v1319
      %1641 = vmatprep.subr.bf16.mxu0 %v1327
      %1642 = vmatpush1.bf16.msra.mxu0 %v1326
      %1643 = vmatprep.subr.bf16.mxu0 %v1334
      %1644 = vmatpush1.bf16.msra.mxu0 %v1333
      %1645 = vmatprep.subr.bf16.mxu0 %v1341
      %1646 = vmatpush1.bf16.msra.mxu0 %v1340
      %1647 = vmatprep.subr.bf16.mxu0 %v1348
      %1648 = vmatpush1.bf16.msra.mxu0 %v1347
      %1649 = vmatprep.subr.bf16.mxu0 %v1355
      %1650 = vmatpush1.bf16.msra.mxu0 %v1354
      %1651 = vmatprep.subr.bf16.mxu0 %v1362
      %1652 = vmatpush1.bf16.msra.mxu0 %v1361
      %1653 = vmatprep.subr.bf16.mxu0 %v1369
      %1654 = vmatpush1.bf16.msra.mxu0 %v1368
      %1655 = vmatprep.subr.bf16.mxu0 %v1376
      %1656 = vmatpush1.bf16.msra.mxu0 %v1375
      %1657 = vmatprep.subr.bf16.mxu0 %v1383
      %1658 = vmatpush1.bf16.msra.mxu0 %v1382
      %1659 = vmatprep.subr.bf16.mxu0 %v1390
      %1660 = vmatpush1.bf16.msra.mxu0 %v1389
      %1661 = vmatprep.subr.bf16.mxu0 %v1397
      %1662 = vmatpush1.bf16.msra.mxu0 %v1396
      %1663 = vmatprep.subr.bf16.mxu0 %v1404
      %1664 = vmatpush1.bf16.msra.mxu0 %v1403
      %1665 = vmatprep.mubr.bf16.mxu0 %v764
      %1666 = vmatmul.mubr.bf16.gmra.mrb[0].mxu0 %v763
      %v1667 = vpop.f32.mrb[0].mxu0
      %v1668 = vadd.f32 %v920, %v1667
      %v1669 = vpop.f32.mrb[0].mxu0
      %v1670 = vadd.f32 %v924, %v1669
      %v1671 = vpop.f32.mrb[0].mxu0
      %v1672 = vadd.f32 %v920, %v1671
      %v1673 = vpop.f32.mrb[0].mxu0
      %v1674 = vadd.f32 %v924, %v1673
      %1675 = vmatprep.mubr.bf16.mxu0 %v766
      %1676 = vmatmul.mubr.bf16.gmra.mrb[0].mxu0 %v765
      %v1677 = vpop.f32.mrb[0].mxu0
      %v1678 = vadd.f32 %v920, %v1677
      %v1679 = vpop.f32.mrb[0].mxu0
      %v1680 = vadd.f32 %v924, %v1679
      %v1681 = vpop.f32.mrb[0].mxu0
      %v1682 = vadd.f32 %v920, %v1681
      %v1683 = vpop.f32.mrb[0].mxu0
      %v1684 = vadd.f32 %v924, %v1683
      %1685 = vmatprep.mubr.bf16.mxu0 %v768
      %1686 = vmatmul.mubr.bf16.gmra.mrb[0].mxu0 %v767
      %v1687 = vpop.f32.mrb[0].mxu0
      %v1688 = vadd.f32 %v920, %v1687
      %v1689 = vpop.f32.mrb[0].mxu0
      %v1690 = vadd.f32 %v924, %v1689
      %v1691 = vpop.f32.mrb[0].mxu0
      %v1692 = vadd.f32 %v920, %v1691
      %v1693 = vpop.f32.mrb[0].mxu0
      %v1694 = vadd.f32 %v924, %v1693
      %1695 = vmatprep.mubr.bf16.mxu0 %v770
      %1696 = vmatmul.mubr.bf16.gmra.mrb[0].mxu0 %v769
      %v1697 = vpop.f32.mrb[0].mxu0
      %v1698 = vadd.f32 %v920, %v1697
      %v1699 = vpop.f32.mrb[0].mxu0
      %v1700 = vadd.f32 %v924, %v1699
      %v1701 = vpop.f32.mrb[0].mxu0
      %v1702 = vadd.f32 %v920, %v1701
      %v1703 = vpop.f32.mrb[0].mxu0
      %v1704 = vadd.f32 %v924, %v1703
      %1705 = vmatprep.mubr.bf16.mxu0 %v772
      %1706 = vmatmul.mubr.bf16.gmra.mrb[0].mxu0 %v771
      %v1707 = vpop.f32.mrb[0].mxu0
      %v1708 = vadd.f32 %v920, %v1707
      %v1709 = vpop.f32.mrb[0].mxu0
      %v1710 = vadd.f32 %v924, %v1709
      %v1711 = vpop.f32.mrb[0].mxu0
      %v1712 = vadd.f32 %v920, %v1711
      %v1713 = vpop.f32.mrb[0].mxu0
      %v1714 = vadd.f32 %v924, %v1713
      %1715 = vmatprep.mubr.bf16.mxu0 %v774
      %1716 = vmatmul.mubr.bf16.gmra.mrb[0].mxu0 %v773
      %v1717 = vpop.f32.mrb[0].mxu0
      %v1718 = vadd.f32 %v920, %v1717
      %v1719 = vpop.f32.mrb[0].mxu0
      %v1720 = vadd.f32 %v924, %v1719
      %v1721 = vpop.f32.mrb[0].mxu0
      %v1722 = vadd.f32 %v920, %v1721
      %v1723 = vpop.f32.mrb[0].mxu0
      %v1724 = vadd.f32 %v924, %v1723
      %1725 = vmatprep.mubr.bf16.mxu0 %v776
      %1726 = vmatmul.mubr.bf16.gmra.mrb[0].mxu0 %v775
      %v1727 = vpop.f32.mrb[0].mxu0
      %v1728 = vadd.f32 %v920, %v1727
      %v1729 = vpop.f32.mrb[0].mxu0
      %v1730 = vadd.f32 %v924, %v1729
      %v1731 = vpop.f32.mrb[0].mxu0
      %v1732 = vadd.f32 %v920, %v1731
      %v1733 = vpop.f32.mrb[0].mxu0
      %v1734 = vadd.f32 %v924, %v1733
      %1735 = vmatprep.mubr.bf16.mxu0 %v778
      %1736 = vmatmul.mubr.bf16.gmra.mrb[0].mxu0 %v777
      %v1737 = vpop.f32.mrb[0].mxu0
      %v1738 = vadd.f32 %v920, %v1737
      %v1739 = vpop.f32.mrb[0].mxu0
      %v1740 = vadd.f32 %v924, %v1739
      %v1741 = vpop.f32.mrb[0].mxu0
      %v1742 = vadd.f32 %v920, %v1741
      %v1743 = vpop.f32.mrb[0].mxu0
      %v1744 = vadd.f32 %v924, %v1743
      %1745 = vdwg.mxu0
      %1746 = vmatprep.subr.bf16.mxu0 %v1301
      %1747 = vmatpush1.bf16.msra.mxu0 %v1300
      %1748 = vmatprep.subr.bf16.mxu0 %v1308
      %1749 = vmatpush1.bf16.msra.mxu0 %v1307
      %1750 = vmatprep.subr.bf16.mxu0 %v1315
      %1751 = vmatpush1.bf16.msra.mxu0 %v1314
      %1752 = vmatprep.subr.bf16.mxu0 %v1322
      %1753 = vmatpush1.bf16.msra.mxu0 %v1321
      %1754 = vmatprep.subr.bf16.mxu0 %v1329
      %1755 = vmatpush1.bf16.msra.mxu0 %v1328
      %1756 = vmatprep.subr.bf16.mxu0 %v1336
      %1757 = vmatpush1.bf16.msra.mxu0 %v1335
      %1758 = vmatprep.subr.bf16.mxu0 %v1343
      %1759 = vmatpush1.bf16.msra.mxu0 %v1342
      %1760 = vmatprep.subr.bf16.mxu0 %v1350
      %1761 = vmatpush1.bf16.msra.mxu0 %v1349
      %1762 = vmatprep.subr.bf16.mxu0 %v1357
      %1763 = vmatpush1.bf16.msra.mxu0 %v1356
      %1764 = vmatprep.subr.bf16.mxu0 %v1364
      %1765 = vmatpush1.bf16.msra.mxu0 %v1363
      %1766 = vmatprep.subr.bf16.mxu0 %v1371
      %1767 = vmatpush1.bf16.msra.mxu0 %v1370
      %1768 = vmatprep.subr.bf16.mxu0 %v1378
      %1769 = vmatpush1.bf16.msra.mxu0 %v1377
      %1770 = vmatprep.subr.bf16.mxu0 %v1385
      %1771 = vmatpush1.bf16.msra.mxu0 %v1384
      %1772 = vmatprep.subr.bf16.mxu0 %v1392
      %1773 = vmatpush1.bf16.msra.mxu0 %v1391
      %1774 = vmatprep.subr.bf16.mxu0 %v1399
      %1775 = vmatpush1.bf16.msra.mxu0 %v1398
      %1776 = vmatprep.subr.bf16.mxu0 %v1406
      %1777 = vmatpush1.bf16.msra.mxu0 %v1405
      %1778 = vmatprep.mubr.bf16.mxu0 %v764
      %1779 = vmatmul.mubr.bf16.gmra.mrb[0].mxu0 %v763
      %v1780 = vpop.f32.mrb[0].mxu0
      %v1781 = vadd.f32 %v928, %v1780
      %v1782 = vpop.f32.mrb[0].mxu0
      %v1783 = vadd.f32 %v932, %v1782
      %v1784 = vpop.f32.mrb[0].mxu0
      %v1785 = vadd.f32 %v928, %v1784
      %v1786 = vpop.f32.mrb[0].mxu0
      %v1787 = vadd.f32 %v932, %v1786
      %1788 = vmatprep.mubr.bf16.mxu0 %v766
      %1789 = vmatmul.mubr.bf16.gmra.mrb[0].mxu0 %v765
      %v1790 = vpop.f32.mrb[0].mxu0
      %v1791 = vadd.f32 %v928, %v1790
      %v1792 = vpop.f32.mrb[0].mxu0
      %v1793 = vadd.f32 %v932, %v1792
      %v1794 = vpop.f32.mrb[0].mxu0
      %v1795 = vadd.f32 %v928, %v1794
      %v1796 = vpop.f32.mrb[0].mxu0
      %v1797 = vadd.f32 %v932, %v1796
      %1798 = vmatprep.mubr.bf16.mxu0 %v768
      %1799 = vmatmul.mubr.bf16.gmra.mrb[0].mxu0 %v767
      %v1800 = vpop.f32.mrb[0].mxu0
      %v1801 = vadd.f32 %v928, %v1800
      %v1802 = vpop.f32.mrb[0].mxu0
      %v1803 = vadd.f32 %v932, %v1802
      %v1804 = vpop.f32.mrb[0].mxu0
      %v1805 = vadd.f32 %v928, %v1804
      %v1806 = vpop.f32.mrb[0].mxu0
      %v1807 = vadd.f32 %v932, %v1806
      %1808 = vmatprep.mubr.bf16.mxu0 %v770
      %1809 = vmatmul.mubr.bf16.gmra.mrb[0].mxu0 %v769
      %v1810 = vpop.f32.mrb[0].mxu0
      %v1811 = vadd.f32 %v928, %v1810
      %v1812 = vpop.f32.mrb[0].mxu0
      %v1813 = vadd.f32 %v932, %v1812
      %v1814 = vpop.f32.mrb[0].mxu0
      %v1815 = vadd.f32 %v928, %v1814
      %v1816 = vpop.f32.mrb[0].mxu0
      %v1817 = vadd.f32 %v932, %v1816
      %1818 = vmatprep.mubr.bf16.mxu0 %v772
      %1819 = vmatmul.mubr.bf16.gmra.mrb[0].mxu0 %v771
      %v1820 = vpop.f32.mrb[0].mxu0
      %v1821 = vadd.f32 %v928, %v1820
      %v1822 = vpop.f32.mrb[0].mxu0
      %v1823 = vadd.f32 %v932, %v1822
      %v1824 = vpop.f32.mrb[0].mxu0
      %v1825 = vadd.f32 %v928, %v1824
      %v1826 = vpop.f32.mrb[0].mxu0
      %v1827 = vadd.f32 %v932, %v1826
      %1828 = vmatprep.mubr.bf16.mxu0 %v774
      %1829 = vmatmul.mubr.bf16.gmra.mrb[0].mxu0 %v773
      %v1830 = vpop.f32.mrb[0].mxu0
      %v1831 = vadd.f32 %v928, %v1830
      %v1832 = vpop.f32.mrb[0].mxu0
      %v1833 = vadd.f32 %v932, %v1832
      %v1834 = vpop.f32.mrb[0].mxu0
      %v1835 = vadd.f32 %v928, %v1834
      %v1836 = vpop.f32.mrb[0].mxu0
      %v1837 = vadd.f32 %v932, %v1836
      %1838 = vmatprep.mubr.bf16.mxu0 %v776
      %1839 = vmatmul.mubr.bf16.gmra.mrb[0].mxu0 %v775
      %v1840 = vpop.f32.mrb[0].mxu0
      %v1841 = vadd.f32 %v928, %v1840
      %v1842 = vpop.f32.mrb[0].mxu0
      %v1843 = vadd.f32 %v932, %v1842
      %v1844 = vpop.f32.mrb[0].mxu0
      %v1845 = vadd.f32 %v928, %v1844
      %v1846 = vpop.f32.mrb[0].mxu0
      %v1847 = vadd.f32 %v932, %v1846
      %1848 = vmatprep.mubr.bf16.mxu0 %v778
      %1849 = vmatmul.mubr.bf16.gmra.mrb[0].mxu0 %v777
      %v1850 = vpop.f32.mrb[0].mxu0
      %v1851 = vadd.f32 %v928, %v1850
      %v1852 = vpop.f32.mrb[0].mxu0
      %v1853 = vadd.f32 %v932, %v1852
      %v1854 = vpop.f32.mrb[0].mxu0
      %v1855 = vadd.f32 %v928, %v1854
      %v1856 = vpop.f32.mrb[0].mxu0
      %v1857 = vadd.f32 %v932, %v1856
      %1858 = vdwg.mxu0
      %1859 = vmatprep.subr.bf16.mxu0 0
      %1860 = vmatpush1.bf16.msra.mxu0 %v1302
      %1861 = vmatprep.subr.bf16.mxu0 0
      %1862 = vmatpush1.bf16.msra.mxu0 %v1309
      %1863 = vmatprep.subr.bf16.mxu0 0
      %1864 = vmatpush1.bf16.msra.mxu0 %v1316
      %1865 = vmatprep.subr.bf16.mxu0 0
      %1866 = vmatpush1.bf16.msra.mxu0 %v1323
      %1867 = vmatprep.subr.bf16.mxu0 0
      %1868 = vmatpush1.bf16.msra.mxu0 %v1330
      %1869 = vmatprep.subr.bf16.mxu0 0
      %1870 = vmatpush1.bf16.msra.mxu0 %v1337
      %1871 = vmatprep.subr.bf16.mxu0 0
      %1872 = vmatpush1.bf16.msra.mxu0 %v1344
      %1873 = vmatprep.subr.bf16.mxu0 0
      %1874 = vmatpush1.bf16.msra.mxu0 %v1351
      %1875 = vmatprep.subr.bf16.mxu0 0
      %1876 = vmatpush1.bf16.msra.mxu0 %v1358
      %1877 = vmatprep.subr.bf16.mxu0 0
      %1878 = vmatpush1.bf16.msra.mxu0 %v1365
      %1879 = vmatprep.subr.bf16.mxu0 0
      %1880 = vmatpush1.bf16.msra.mxu0 %v1372
      %1881 = vmatprep.subr.bf16.mxu0 0
      %1882 = vmatpush1.bf16.msra.mxu0 %v1379
      %1883 = vmatprep.subr.bf16.mxu0 0
      %1884 = vmatpush1.bf16.msra.mxu0 %v1386
      %1885 = vmatprep.subr.bf16.mxu0 0
      %1886 = vmatpush1.bf16.msra.mxu0 %v1393
      %1887 = vmatprep.subr.bf16.mxu0 0
      %1888 = vmatpush1.bf16.msra.mxu0 %v1400
      %1889 = vmatprep.subr.bf16.mxu0 0
      %1890 = vmatpush1.bf16.msra.mxu0 %v1407
      %1891 = vmatprep.mubr.bf16.mxu0 %v764
      %1892 = vmatmul.mubr.bf16.gmra.mrb[0].mxu0 %v763
      %v1893 = vpop.f32.mrb[0].mxu0
      %v1894 = vadd.f32 %v936, %v1893
      %v1895 = vpop.f32.mrb[0].mxu0
      %v1896 = vpop.f32.mrb[0].mxu0
      %v1897 = vadd.f32 %v936, %v1896
      %v1898 = vpop.f32.mrb[0].mxu0
      %1899 = vmatprep.mubr.bf16.mxu0 %v766
      %1900 = vmatmul.mubr.bf16.gmra.mrb[0].mxu0 %v765
      %v1901 = vpop.f32.mrb[0].mxu0
      %v1902 = vadd.f32 %v936, %v1901
      %v1903 = vpop.f32.mrb[0].mxu0
      %v1904 = vpop.f32.mrb[0].mxu0
      %v1905 = vadd.f32 %v936, %v1904
      %v1906 = vpop.f32.mrb[0].mxu0
      %1907 = vmatprep.mubr.bf16.mxu0 %v768
      %1908 = vmatmul.mubr.bf16.gmra.mrb[0].mxu0 %v767
      %v1909 = vpop.f32.mrb[0].mxu0
      %v1910 = vadd.f32 %v936, %v1909
      %v1911 = vpop.f32.mrb[0].mxu0
      %v1912 = vpop.f32.mrb[0].mxu0
      %v1913 = vadd.f32 %v936, %v1912
      %v1914 = vpop.f32.mrb[0].mxu0
      %1915 = vmatprep.mubr.bf16.mxu0 %v770
      %1916 = vmatmul.mubr.bf16.gmra.mrb[0].mxu0 %v769
      %v1917 = vpop.f32.mrb[0].mxu0
      %v1918 = vadd.f32 %v936, %v1917
      %v1919 = vpop.f32.mrb[0].mxu0
      %v1920 = vpop.f32.mrb[0].mxu0
      %v1921 = vadd.f32 %v936, %v1920
      %v1922 = vpop.f32.mrb[0].mxu0
      %1923 = vmatprep.mubr.bf16.mxu0 %v772
      %1924 = vmatmul.mubr.bf16.gmra.mrb[0].mxu0 %v771
      %v1925 = vpop.f32.mrb[0].mxu0
      %v1926 = vadd.f32 %v936, %v1925
      %v1927 = vpop.f32.mrb[0].mxu0
      %v1928 = vpop.f32.mrb[0].mxu0
      %v1929 = vadd.f32 %v936, %v1928
      %v1930 = vpop.f32.mrb[0].mxu0
      %1931 = vmatprep.mubr.bf16.mxu0 %v774
      %1932 = vmatmul.mubr.bf16.gmra.mrb[0].mxu0 %v773
      %v1933 = vpop.f32.mrb[0].mxu0
      %v1934 = vadd.f32 %v936, %v1933
      %v1935 = vpop.f32.mrb[0].mxu0
      %v1936 = vpop.f32.mrb[0].mxu0
      %v1937 = vadd.f32 %v936, %v1936
      %v1938 = vpop.f32.mrb[0].mxu0
      %1939 = vmatprep.mubr.bf16.mxu0 %v776
      %1940 = vmatmul.mubr.bf16.gmra.mrb[0].mxu0 %v775
      %v1941 = vpop.f32.mrb[0].mxu0
      %v1942 = vadd.f32 %v936, %v1941
      %v1943 = vpop.f32.mrb[0].mxu0
      %v1944 = vpop.f32.mrb[0].mxu0
      %v1945 = vadd.f32 %v936, %v1944
      %v1946 = vpop.f32.mrb[0].mxu0
      %1947 = vmatprep.mubr.bf16.mxu0 %v778
      %1948 = vmatmul.mubr.bf16.gmra.mrb[0].mxu0 %v777
      %v1949 = vpop.f32.mrb[0].mxu0
      %v1950 = vadd.f32 %v936, %v1949
      %v1951 = vpop.f32.mrb[0].mxu0
      %v1952 = vpop.f32.mrb[0].mxu0
      %v1953 = vadd.f32 %v936, %v1952
      %v1954 = vpop.f32.mrb[0].mxu0
      %1955 = vdwg.mxu0
      %v1956 = vmul.f32 %v1555, 0.5
      %v1957 = vmul.f32 %v1557, 0.5
      %v1958 = vmul.f32 %v1668, 0.5
      %v1959 = vmul.f32 %v1670, 0.5
      %v1960 = vmul.f32 %v1781, 0.5
      %v1961 = vmul.f32 %v1783, 0.5
      %v1962 = vmul.f32 %v1894, 0.5
      %v1963 = vmul.f32 %v1559, 0.5
      %v1964 = vmul.f32 %v1561, 0.5
      %v1965 = vmul.f32 %v1672, 0.5
      %v1966 = vmul.f32 %v1674, 0.5
      %v1967 = vmul.f32 %v1785, 0.5
      %v1968 = vmul.f32 %v1787, 0.5
      %v1969 = vmul.f32 %v1897, 0.5
      %v1970 = vmul.f32 %v1565, 0.5
      %v1971 = vmul.f32 %v1567, 0.5
      %v1972 = vmul.f32 %v1678, 0.5
      %v1973 = vmul.f32 %v1680, 0.5
      %v1974 = vmul.f32 %v1791, 0.5
      %v1975 = vmul.f32 %v1793, 0.5
      %v1976 = vmul.f32 %v1902, 0.5
      %v1977 = vmul.f32 %v1569, 0.5
      %v1978 = vmul.f32 %v1571, 0.5
      %v1979 = vmul.f32 %v1682, 0.5
      %v1980 = vmul.f32 %v1684, 0.5
      %v1981 = vmul.f32 %v1795, 0.5
      %v1982 = vmul.f32 %v1797, 0.5
      %v1983 = vmul.f32 %v1905, 0.5
      %v1984 = vmul.f32 %v1575, 0.5
      %v1985 = vmul.f32 %v1577, 0.5
      %v1986 = vmul.f32 %v1688, 0.5
      %v1987 = vmul.f32 %v1690, 0.5
      %v1988 = vmul.f32 %v1801, 0.5
      %v1989 = vmul.f32 %v1803, 0.5
      %v1990 = vmul.f32 %v1910, 0.5
      %v1991 = vmul.f32 %v1579, 0.5
      %v1992 = vmul.f32 %v1581, 0.5
      %v1993 = vmul.f32 %v1692, 0.5
      %v1994 = vmul.f32 %v1694, 0.5
      %v1995 = vmul.f32 %v1805, 0.5
      %v1996 = vmul.f32 %v1807, 0.5
      %v1997 = vmul.f32 %v1913, 0.5
      %v1998 = vmul.f32 %v1585, 0.5
      %v1999 = vmul.f32 %v1587, 0.5
      %v2000 = vmul.f32 %v1698, 0.5
      %v2001 = vmul.f32 %v1700, 0.5
      %v2002 = vmul.f32 %v1811, 0.5
      %v2003 = vmul.f32 %v1813, 0.5
      %v2004 = vmul.f32 %v1918, 0.5
      %v2005 = vmul.f32 %v1589, 0.5
      %v2006 = vmul.f32 %v1591, 0.5
      %v2007 = vmul.f32 %v1702, 0.5
      %v2008 = vmul.f32 %v1704, 0.5
      %v2009 = vmul.f32 %v1815, 0.5
      %v2010 = vmul.f32 %v1817, 0.5
      %v2011 = vmul.f32 %v1921, 0.5
      %v2012 = vmul.f32 %v1595, 0.5
      %v2013 = vmul.f32 %v1597, 0.5
      %v2014 = vmul.f32 %v1708, 0.5
      %v2015 = vmul.f32 %v1710, 0.5
      %v2016 = vmul.f32 %v1821, 0.5
      %v2017 = vmul.f32 %v1823, 0.5
      %v2018 = vmul.f32 %v1926, 0.5
      %v2019 = vmul.f32 %v1599, 0.5
      %v2020 = vmul.f32 %v1601, 0.5
      %v2021 = vmul.f32 %v1712, 0.5
      %v2022 = vmul.f32 %v1714, 0.5
      %v2023 = vmul.f32 %v1825, 0.5
      %v2024 = vmul.f32 %v1827, 0.5
      %v2025 = vmul.f32 %v1929, 0.5
      %v2026 = vmul.f32 %v1605, 0.5
      %v2027 = vmul.f32 %v1607, 0.5
      %v2028 = vmul.f32 %v1718, 0.5
      %v2029 = vmul.f32 %v1720, 0.5
      %v2030 = vmul.f32 %v1831, 0.5
      %v2031 = vmul.f32 %v1833, 0.5
      %v2032 = vmul.f32 %v1934, 0.5
      %v2033 = vmul.f32 %v1609, 0.5
      %v2034 = vmul.f32 %v1611, 0.5
      %v2035 = vmul.f32 %v1722, 0.5
      %v2036 = vmul.f32 %v1724, 0.5
      %v2037 = vmul.f32 %v1835, 0.5
      %v2038 = vmul.f32 %v1837, 0.5
      %v2039 = vmul.f32 %v1937, 0.5
      %v2040 = vmul.f32 %v1615, 0.5
      %v2041 = vmul.f32 %v1617, 0.5
      %v2042 = vmul.f32 %v1728, 0.5
      %v2043 = vmul.f32 %v1730, 0.5
      %v2044 = vmul.f32 %v1841, 0.5
      %v2045 = vmul.f32 %v1843, 0.5
      %v2046 = vmul.f32 %v1942, 0.5
      %v2047 = vmul.f32 %v1619, 0.5
      %v2048 = vmul.f32 %v1621, 0.5
      %v2049 = vmul.f32 %v1732, 0.5
      %v2050 = vmul.f32 %v1734, 0.5
      %v2051 = vmul.f32 %v1845, 0.5
      %v2052 = vmul.f32 %v1847, 0.5
      %v2053 = vmul.f32 %v1945, 0.5
      %v2054 = vmul.f32 %v1625, 0.5
      %v2055 = vmul.f32 %v1627, 0.5
      %v2056 = vmul.f32 %v1738, 0.5
      %v2057 = vmul.f32 %v1740, 0.5
      %v2058 = vmul.f32 %v1851, 0.5
      %v2059 = vmul.f32 %v1853, 0.5
      %v2060 = vmul.f32 %v1950, 0.5
      %v2061 = vmul.f32 %v1629, 0.5
      %v2062 = vmul.f32 %v1631, 0.5
      %v2063 = vmul.f32 %v1742, 0.5
      %v2064 = vmul.f32 %v1744, 0.5
      %v2065 = vmul.f32 %v1855, 0.5
      %v2066 = vmul.f32 %v1857, 0.5
      %v2067 = vmul.f32 %v1953, 0.5
      %v2068 = vtanh.pop %v1956
      %v2069 = vtanh.pop %v1957
      %v2070 = vtanh.pop %v1958
      %v2071 = vtanh.pop %v1959
      %v2072 = vtanh.pop %v1960
      %v2073 = vtanh.pop %v1961
      %v2074 = vtanh.pop %v1962
      %v2075 = vtanh.pop %v1963
      %v2076 = vtanh.pop %v1964
      %v2077 = vtanh.pop %v1965
      %v2078 = vtanh.pop %v1966
      %v2079 = vtanh.pop %v1967
      %v2080 = vtanh.pop %v1968
      %v2081 = vtanh.pop %v1969
      %v2082 = vtanh.pop %v1970
      %v2083 = vtanh.pop %v1971
      %v2084 = vtanh.pop %v1972
      %v2085 = vtanh.pop %v1973
      %v2086 = vtanh.pop %v1974
      %v2087 = vtanh.pop %v1975
      %v2088 = vtanh.pop %v1976
      %v2089 = vtanh.pop %v1977
      %v2090 = vtanh.pop %v1978
      %v2091 = vtanh.pop %v1979
      %v2092 = vtanh.pop %v1980
      %v2093 = vtanh.pop %v1981
      %v2094 = vtanh.pop %v1982
      %v2095 = vtanh.pop %v1983
      %v2096 = vtanh.pop %v1984
      %v2097 = vtanh.pop %v1985
      %v2098 = vtanh.pop %v1986
      %v2099 = vtanh.pop %v1987
      %v2100 = vtanh.pop %v1988
      %v2101 = vtanh.pop %v1989
      %v2102 = vtanh.pop %v1990
      %v2103 = vtanh.pop %v1991
      %v2104 = vtanh.pop %v1992
      %v2105 = vtanh.pop %v1993
      %v2106 = vtanh.pop %v1994
      %v2107 = vtanh.pop %v1995
      %v2108 = vtanh.pop %v1996
      %v2109 = vtanh.pop %v1997
      %v2110 = vtanh.pop %v1998
      %v2111 = vtanh.pop %v1999
      %v2112 = vtanh.pop %v2000
      %v2113 = vtanh.pop %v2001
      %v2114 = vtanh.pop %v2002
      %v2115 = vtanh.pop %v2003
      %v2116 = vtanh.pop %v2004
      %v2117 = vtanh.pop %v2005
      %v2118 = vtanh.pop %v2006
      %v2119 = vtanh.pop %v2007
      %v2120 = vtanh.pop %v2008
      %v2121 = vtanh.pop %v2009
      %v2122 = vtanh.pop %v2010
      %v2123 = vtanh.pop %v2011
      %v2124 = vtanh.pop %v2012
      %v2125 = vtanh.pop %v2013
      %v2126 = vtanh.pop %v2014
      %v2127 = vtanh.pop %v2015
      %v2128 = vtanh.pop %v2016
      %v2129 = vtanh.pop %v2017
      %v2130 = vtanh.pop %v2018
      %v2131 = vtanh.pop %v2019
      %v2132 = vtanh.pop %v2020
      %v2133 = vtanh.pop %v2021
      %v2134 = vtanh.pop %v2022
      %v2135 = vtanh.pop %v2023
      %v2136 = vtanh.pop %v2024
      %v2137 = vtanh.pop %v2025
      %v2138 = vtanh.pop %v2026
      %v2139 = vtanh.pop %v2027
      %v2140 = vtanh.pop %v2028
      %v2141 = vtanh.pop %v2029
      %v2142 = vtanh.pop %v2030
      %v2143 = vtanh.pop %v2031
      %v2144 = vtanh.pop %v2032
      %v2145 = vtanh.pop %v2033
      %v2146 = vtanh.pop %v2034
      %v2147 = vtanh.pop %v2035
      %v2148 = vtanh.pop %v2036
      %v2149 = vtanh.pop %v2037
      %v2150 = vtanh.pop %v2038
      %v2151 = vtanh.pop %v2039
      %v2152 = vtanh.pop %v2040
      %v2153 = vtanh.pop %v2041
      %v2154 = vtanh.pop %v2042
      %v2155 = vtanh.pop %v2043
      %v2156 = vtanh.pop %v2044
      %v2157 = vtanh.pop %v2045
      %v2158 = vtanh.pop %v2046
      %v2159 = vtanh.pop %v2047
      %v2160 = vtanh.pop %v2048
      %v2161 = vtanh.pop %v2049
      %v2162 = vtanh.pop %v2050
      %v2163 = vtanh.pop %v2051
      %v2164 = vtanh.pop %v2052
      %v2165 = vtanh.pop %v2053
      %v2166 = vtanh.pop %v2054
      %v2167 = vtanh.pop %v2055
      %v2168 = vtanh.pop %v2056
      %v2169 = vtanh.pop %v2057
      %v2170 = vtanh.pop %v2058
      %v2171 = vtanh.pop %v2059
      %v2172 = vtanh.pop %v2060
      %v2173 = vtanh.pop %v2061
      %v2174 = vtanh.pop %v2062
      %v2175 = vtanh.pop %v2063
      %v2176 = vtanh.pop %v2064
      %v2177 = vtanh.pop %v2065
      %v2178 = vtanh.pop %v2066
      %v2179 = vtanh.pop %v2067
      %v2180 = vadd.f32 %v2068, 1.0
      %v2181 = vadd.f32 %v2069, 1.0
      %v2182 = vadd.f32 %v2070, 1.0
      %v2183 = vadd.f32 %v2071, 1.0
      %v2184 = vadd.f32 %v2072, 1.0
      %v2185 = vadd.f32 %v2073, 1.0
      %v2186 = vadd.f32 %v2074, 1.0
      %v2187 = vadd.f32 %v2075, 1.0
      %v2188 = vadd.f32 %v2076, 1.0
      %v2189 = vadd.f32 %v2077, 1.0
      %v2190 = vadd.f32 %v2078, 1.0
      %v2191 = vadd.f32 %v2079, 1.0
      %v2192 = vadd.f32 %v2080, 1.0
      %v2193 = vadd.f32 %v2081, 1.0
      %v2194 = vadd.f32 %v2082, 1.0
      %v2195 = vadd.f32 %v2083, 1.0
      %v2196 = vadd.f32 %v2084, 1.0
      %v2197 = vadd.f32 %v2085, 1.0
      %v2198 = vadd.f32 %v2086, 1.0
      %v2199 = vadd.f32 %v2087, 1.0
      %v2200 = vadd.f32 %v2088, 1.0
      %v2201 = vadd.f32 %v2089, 1.0
      %v2202 = vadd.f32 %v2090, 1.0
      %v2203 = vadd.f32 %v2091, 1.0
      %v2204 = vadd.f32 %v2092, 1.0
      %v2205 = vadd.f32 %v2093, 1.0
      %v2206 = vadd.f32 %v2094, 1.0
      %v2207 = vadd.f32 %v2095, 1.0
      %v2208 = vadd.f32 %v2096, 1.0
      %v2209 = vadd.f32 %v2097, 1.0
      %v2210 = vadd.f32 %v2098, 1.0
      %v2211 = vadd.f32 %v2099, 1.0
      %v2212 = vadd.f32 %v2100, 1.0
      %v2213 = vadd.f32 %v2101, 1.0
      %v2214 = vadd.f32 %v2102, 1.0
      %v2215 = vadd.f32 %v2103, 1.0
      %v2216 = vadd.f32 %v2104, 1.0
      %v2217 = vadd.f32 %v2105, 1.0
      %v2218 = vadd.f32 %v2106, 1.0
      %v2219 = vadd.f32 %v2107, 1.0
      %v2220 = vadd.f32 %v2108, 1.0
      %v2221 = vadd.f32 %v2109, 1.0
      %v2222 = vadd.f32 %v2110, 1.0
      %v2223 = vadd.f32 %v2111, 1.0
      %v2224 = vadd.f32 %v2112, 1.0
      %v2225 = vadd.f32 %v2113, 1.0
      %v2226 = vadd.f32 %v2114, 1.0
      %v2227 = vadd.f32 %v2115, 1.0
      %v2228 = vadd.f32 %v2116, 1.0
      %v2229 = vadd.f32 %v2117, 1.0
      %v2230 = vadd.f32 %v2118, 1.0
      %v2231 = vadd.f32 %v2119, 1.0
      %v2232 = vadd.f32 %v2120, 1.0
      %v2233 = vadd.f32 %v2121, 1.0
      %v2234 = vadd.f32 %v2122, 1.0
      %v2235 = vadd.f32 %v2123, 1.0
      %v2236 = vadd.f32 %v2124, 1.0
      %v2237 = vadd.f32 %v2125, 1.0
      %v2238 = vadd.f32 %v2126, 1.0
      %v2239 = vadd.f32 %v2127, 1.0
      %v2240 = vadd.f32 %v2128, 1.0
      %v2241 = vadd.f32 %v2129, 1.0
      %v2242 = vadd.f32 %v2130, 1.0
      %v2243 = vadd.f32 %v2131, 1.0
      %v2244 = vadd.f32 %v2132, 1.0
      %v2245 = vadd.f32 %v2133, 1.0
      %v2246 = vadd.f32 %v2134, 1.0
      %v2247 = vadd.f32 %v2135, 1.0
      %v2248 = vadd.f32 %v2136, 1.0
      %v2249 = vadd.f32 %v2137, 1.0
      %v2250 = vadd.f32 %v2138, 1.0
      %v2251 = vadd.f32 %v2139, 1.0
      %v2252 = vadd.f32 %v2140, 1.0
      %v2253 = vadd.f32 %v2141, 1.0
      %v2254 = vadd.f32 %v2142, 1.0
      %v2255 = vadd.f32 %v2143, 1.0
      %v2256 = vadd.f32 %v2144, 1.0
      %v2257 = vadd.f32 %v2145, 1.0
      %v2258 = vadd.f32 %v2146, 1.0
      %v2259 = vadd.f32 %v2147, 1.0
      %v2260 = vadd.f32 %v2148, 1.0
      %v2261 = vadd.f32 %v2149, 1.0
      %v2262 = vadd.f32 %v2150, 1.0
      %v2263 = vadd.f32 %v2151, 1.0
      %v2264 = vadd.f32 %v2152, 1.0
      %v2265 = vadd.f32 %v2153, 1.0
      %v2266 = vadd.f32 %v2154, 1.0
      %v2267 = vadd.f32 %v2155, 1.0
      %v2268 = vadd.f32 %v2156, 1.0
      %v2269 = vadd.f32 %v2157, 1.0
      %v2270 = vadd.f32 %v2158, 1.0
      %v2271 = vadd.f32 %v2159, 1.0
      %v2272 = vadd.f32 %v2160, 1.0
      %v2273 = vadd.f32 %v2161, 1.0
      %v2274 = vadd.f32 %v2162, 1.0
      %v2275 = vadd.f32 %v2163, 1.0
      %v2276 = vadd.f32 %v2164, 1.0
      %v2277 = vadd.f32 %v2165, 1.0
      %v2278 = vadd.f32 %v2166, 1.0
      %v2279 = vadd.f32 %v2167, 1.0
      %v2280 = vadd.f32 %v2168, 1.0
      %v2281 = vadd.f32 %v2169, 1.0
      %v2282 = vadd.f32 %v2170, 1.0
      %v2283 = vadd.f32 %v2171, 1.0
      %v2284 = vadd.f32 %v2172, 1.0
      %v2285 = vadd.f32 %v2173, 1.0
      %v2286 = vadd.f32 %v2174, 1.0
      %v2287 = vadd.f32 %v2175, 1.0
      %v2288 = vadd.f32 %v2176, 1.0
      %v2289 = vadd.f32 %v2177, 1.0
      %v2290 = vadd.f32 %v2178, 1.0
      %v2291 = vadd.f32 %v2179, 1.0
      %v2292 = vmul.f32 %v2180, 0.5
      %v2293 = vmul.f32 %v2181, 0.5
      %v2294 = vmul.f32 %v2182, 0.5
      %v2295 = vmul.f32 %v2183, 0.5
      %v2296 = vmul.f32 %v2184, 0.5
      %v2297 = vmul.f32 %v2185, 0.5
      %v2298 = vmul.f32 %v2186, 0.5
      %v2299 = vmul.f32 %v2187, 0.5
      %v2300 = vmul.f32 %v2188, 0.5
      %v2301 = vmul.f32 %v2189, 0.5
      %v2302 = vmul.f32 %v2190, 0.5
      %v2303 = vmul.f32 %v2191, 0.5
      %v2304 = vmul.f32 %v2192, 0.5
      %v2305 = vmul.f32 %v2193, 0.5
      %v2306 = vmul.f32 %v2194, 0.5
      %v2307 = vmul.f32 %v2195, 0.5
      %v2308 = vmul.f32 %v2196, 0.5
      %v2309 = vmul.f32 %v2197, 0.5
      %v2310 = vmul.f32 %v2198, 0.5
      %v2311 = vmul.f32 %v2199, 0.5
      %v2312 = vmul.f32 %v2200, 0.5
      %v2313 = vmul.f32 %v2201, 0.5
      %v2314 = vmul.f32 %v2202, 0.5
      %v2315 = vmul.f32 %v2203, 0.5
      %v2316 = vmul.f32 %v2204, 0.5
      %v2317 = vmul.f32 %v2205, 0.5
      %v2318 = vmul.f32 %v2206, 0.5
      %v2319 = vmul.f32 %v2207, 0.5
      %v2320 = vmul.f32 %v2208, 0.5
      %v2321 = vmul.f32 %v2209, 0.5
      %v2322 = vmul.f32 %v2210, 0.5
      %v2323 = vmul.f32 %v2211, 0.5
      %v2324 = vmul.f32 %v2212, 0.5
      %v2325 = vmul.f32 %v2213, 0.5
      %v2326 = vmul.f32 %v2214, 0.5
      %v2327 = vmul.f32 %v2215, 0.5
      %v2328 = vmul.f32 %v2216, 0.5
      %v2329 = vmul.f32 %v2217, 0.5
      %v2330 = vmul.f32 %v2218, 0.5
      %v2331 = vmul.f32 %v2219, 0.5
      %v2332 = vmul.f32 %v2220, 0.5
      %v2333 = vmul.f32 %v2221, 0.5
      %v2334 = vmul.f32 %v2222, 0.5
      %v2335 = vmul.f32 %v2223, 0.5
      %v2336 = vmul.f32 %v2224, 0.5
      %v2337 = vmul.f32 %v2225, 0.5
      %v2338 = vmul.f32 %v2226, 0.5
      %v2339 = vmul.f32 %v2227, 0.5
      %v2340 = vmul.f32 %v2228, 0.5
      %v2341 = vmul.f32 %v2229, 0.5
      %v2342 = vmul.f32 %v2230, 0.5
      %v2343 = vmul.f32 %v2231, 0.5
      %v2344 = vmul.f32 %v2232, 0.5
      %v2345 = vmul.f32 %v2233, 0.5
      %v2346 = vmul.f32 %v2234, 0.5
      %v2347 = vmul.f32 %v2235, 0.5
      %v2348 = vmul.f32 %v2236, 0.5
      %v2349 = vmul.f32 %v2237, 0.5
      %v2350 = vmul.f32 %v2238, 0.5
      %v2351 = vmul.f32 %v2239, 0.5
      %v2352 = vmul.f32 %v2240, 0.5
      %v2353 = vmul.f32 %v2241, 0.5
      %v2354 = vmul.f32 %v2242, 0.5
      %v2355 = vmul.f32 %v2243, 0.5
      %v2356 = vmul.f32 %v2244, 0.5
      %v2357 = vmul.f32 %v2245, 0.5
      %v2358 = vmul.f32 %v2246, 0.5
      %v2359 = vmul.f32 %v2247, 0.5
      %v2360 = vmul.f32 %v2248, 0.5
      %v2361 = vmul.f32 %v2249, 0.5
      %v2362 = vmul.f32 %v2250, 0.5
      %v2363 = vmul.f32 %v2251, 0.5
      %v2364 = vmul.f32 %v2252, 0.5
      %v2365 = vmul.f32 %v2253, 0.5
      %v2366 = vmul.f32 %v2254, 0.5
      %v2367 = vmul.f32 %v2255, 0.5
      %v2368 = vmul.f32 %v2256, 0.5
      %v2369 = vmul.f32 %v2257, 0.5
      %v2370 = vmul.f32 %v2258, 0.5
      %v2371 = vmul.f32 %v2259, 0.5
      %v2372 = vmul.f32 %v2260, 0.5
      %v2373 = vmul.f32 %v2261, 0.5
      %v2374 = vmul.f32 %v2262, 0.5
      %v2375 = vmul.f32 %v2263, 0.5
      %v2376 = vmul.f32 %v2264, 0.5
      %v2377 = vmul.f32 %v2265, 0.5
      %v2378 = vmul.f32 %v2266, 0.5
      %v2379 = vmul.f32 %v2267, 0.5
      %v2380 = vmul.f32 %v2268, 0.5
      %v2381 = vmul.f32 %v2269, 0.5
      %v2382 = vmul.f32 %v2270, 0.5
      %v2383 = vmul.f32 %v2271, 0.5
      %v2384 = vmul.f32 %v2272, 0.5
      %v2385 = vmul.f32 %v2273, 0.5
      %v2386 = vmul.f32 %v2274, 0.5
      %v2387 = vmul.f32 %v2275, 0.5
      %v2388 = vmul.f32 %v2276, 0.5
      %v2389 = vmul.f32 %v2277, 0.5
      %v2390 = vmul.f32 %v2278, 0.5
      %v2391 = vmul.f32 %v2279, 0.5
      %v2392 = vmul.f32 %v2280, 0.5
      %v2393 = vmul.f32 %v2281, 0.5
      %v2394 = vmul.f32 %v2282, 0.5
      %v2395 = vmul.f32 %v2283, 0.5
      %v2396 = vmul.f32 %v2284, 0.5
      %v2397 = vmul.f32 %v2285, 0.5
      %v2398 = vmul.f32 %v2286, 0.5
      %v2399 = vmul.f32 %v2287, 0.5
      %v2400 = vmul.f32 %v2288, 0.5
      %v2401 = vmul.f32 %v2289, 0.5
      %v2402 = vmul.f32 %v2290, 0.5
      %v2403 = vmul.f32 %v2291, 0.5
      %2404 = vst [vmem:[%s282] sm:$0xff] %v2292
      %2405 = vst [vmem:[%s282 + $0x8] sm:$0xff] %v2293
      %2406 = vst [vmem:[%s282 + $0x10] sm:$0xff] %v2294
      %2407 = vst [vmem:[%s282 + $0x18] sm:$0xff] %v2295
      %2408 = vst [vmem:[%s282 + $0x20] sm:$0xff] %v2296
      %2409 = vst [vmem:[%s282 + $0x28] sm:$0xff] %v2297
      %vm2410 = vcmask 130048
      %2411 = vst.msk [vmem:[%s282 + $0x30] sm:$0xff] %vm2410, %v2298
      %2412 = vst [vmem:[%s282 + $0x38] sm:$0xff] %v2299
      %2413 = vst [vmem:[%s282 + $0x40] sm:$0xff] %v2300
      %2414 = vst [vmem:[%s282 + $0x48] sm:$0xff] %v2301
      %2415 = vst [vmem:[%s282 + $0x50] sm:$0xff] %v2302
      %2416 = vst [vmem:[%s282 + $0x58] sm:$0xff] %v2303
      %2417 = vst [vmem:[%s282 + $0x60] sm:$0xff] %v2304
      %2418 = vst.msk [vmem:[%s282 + $0x68] sm:$0xff] %vm2410, %v2305
      %2419 = vst [vmem:[%s282 + $0x70] sm:$0xff] %v2306
      %2420 = vst [vmem:[%s282 + $0x78] sm:$0xff] %v2307
      %2421 = vst [vmem:[%s282 + $0x80] sm:$0xff] %v2308
      %2422 = vst [vmem:[%s282 + $0x88] sm:$0xff] %v2309
      %2423 = vst [vmem:[%s282 + $0x90] sm:$0xff] %v2310
      %2424 = vst [vmem:[%s282 + $0x98] sm:$0xff] %v2311
      %2425 = vst.msk [vmem:[%s282 + $0xa0] sm:$0xff] %vm2410, %v2312
      %2426 = vst [vmem:[%s282 + $0xa8] sm:$0xff] %v2313
      %2427 = vst [vmem:[%s282 + $0xb0] sm:$0xff] %v2314
      %2428 = vst [vmem:[%s282 + $0xb8] sm:$0xff] %v2315
      %2429 = vst [vmem:[%s282 + $0xc0] sm:$0xff] %v2316
      %2430 = vst [vmem:[%s282 + $0xc8] sm:$0xff] %v2317
      %2431 = vst [vmem:[%s282 + $0xd0] sm:$0xff] %v2318
      %2432 = vst.msk [vmem:[%s282 + $0xd8] sm:$0xff] %vm2410, %v2319
      %2433 = vst [vmem:[%s282 + $0xe0] sm:$0xff] %v2320
      %2434 = vst [vmem:[%s282 + $0xe8] sm:$0xff] %v2321
      %2435 = vst [vmem:[%s282 + $0xf0] sm:$0xff] %v2322
      %2436 = vst [vmem:[%s282 + $0xf8] sm:$0xff] %v2323
      %2437 = vst [vmem:[%s282 + $0x100] sm:$0xff] %v2324
      %2438 = vst [vmem:[%s282 + $0x108] sm:$0xff] %v2325
      %2439 = vst.msk [vmem:[%s282 + $0x110] sm:$0xff] %vm2410, %v2326
      %2440 = vst [vmem:[%s282 + $0x118] sm:$0xff] %v2327
      %2441 = vst [vmem:[%s282 + $0x120] sm:$0xff] %v2328
      %2442 = vst [vmem:[%s282 + $0x128] sm:$0xff] %v2329
      %2443 = vst [vmem:[%s282 + $0x130] sm:$0xff] %v2330
      %2444 = vst [vmem:[%s282 + $0x138] sm:$0xff] %v2331
      %2445 = vst [vmem:[%s282 + $0x140] sm:$0xff] %v2332
      %2446 = vst.msk [vmem:[%s282 + $0x148] sm:$0xff] %vm2410, %v2333
      %2447 = vst [vmem:[%s282 + $0x150] sm:$0xff] %v2334
      %2448 = vst [vmem:[%s282 + $0x158] sm:$0xff] %v2335
      %2449 = vst [vmem:[%s282 + $0x160] sm:$0xff] %v2336
      %2450 = vst [vmem:[%s282 + $0x168] sm:$0xff] %v2337
      %2451 = vst [vmem:[%s282 + $0x170] sm:$0xff] %v2338
      %2452 = vst [vmem:[%s282 + $0x178] sm:$0xff] %v2339
      %2453 = vst.msk [vmem:[%s282 + $0x180] sm:$0xff] %vm2410, %v2340
      %2454 = vst [vmem:[%s282 + $0x188] sm:$0xff] %v2341
      %2455 = vst [vmem:[%s282 + $0x190] sm:$0xff] %v2342
      %2456 = vst [vmem:[%s282 + $0x198] sm:$0xff] %v2343
      %2457 = vst [vmem:[%s282 + $0x1a0] sm:$0xff] %v2344
      %2458 = vst [vmem:[%s282 + $0x1a8] sm:$0xff] %v2345
      %2459 = vst [vmem:[%s282 + $0x1b0] sm:$0xff] %v2346
      %2460 = vst.msk [vmem:[%s282 + $0x1b8] sm:$0xff] %vm2410, %v2347
      %2461 = vst [vmem:[%s282 + $0x1c0] sm:$0xff] %v2348
      %2462 = vst [vmem:[%s282 + $0x1c8] sm:$0xff] %v2349
      %2463 = vst [vmem:[%s282 + $0x1d0] sm:$0xff] %v2350
      %2464 = vst [vmem:[%s282 + $0x1d8] sm:$0xff] %v2351
      %2465 = vst [vmem:[%s282 + $0x1e0] sm:$0xff] %v2352
      %2466 = vst [vmem:[%s282 + $0x1e8] sm:$0xff] %v2353
      %2467 = vst.msk [vmem:[%s282 + $0x1f0] sm:$0xff] %vm2410, %v2354
      %2468 = vst [vmem:[%s282 + $0x1f8] sm:$0xff] %v2355
      %2469 = vst [vmem:[%s282 + $0x200] sm:$0xff] %v2356
      %2470 = vst [vmem:[%s282 + $0x208] sm:$0xff] %v2357
      %2471 = vst [vmem:[%s282 + $0x210] sm:$0xff] %v2358
      %2472 = vst [vmem:[%s282 + $0x218] sm:$0xff] %v2359
      %2473 = vst [vmem:[%s282 + $0x220] sm:$0xff] %v2360
      %2474 = vst.msk [vmem:[%s282 + $0x228] sm:$0xff] %vm2410, %v2361
      %2475 = vst [vmem:[%s282 + $0x230] sm:$0xff] %v2362
      %2476 = vst [vmem:[%s282 + $0x238] sm:$0xff] %v2363
      %2477 = vst [vmem:[%s282 + $0x240] sm:$0xff] %v2364
      %2478 = vst [vmem:[%s282 + $0x248] sm:$0xff] %v2365
      %2479 = vst [vmem:[%s282 + $0x250] sm:$0xff] %v2366
      %2480 = vst [vmem:[%s282 + $0x258] sm:$0xff] %v2367
      %2481 = vst.msk [vmem:[%s282 + $0x260] sm:$0xff] %vm2410, %v2368
      %2482 = vst [vmem:[%s282 + $0x268] sm:$0xff] %v2369
      %2483 = vst [vmem:[%s282 + $0x270] sm:$0xff] %v2370
      %2484 = vst [vmem:[%s282 + $0x278] sm:$0xff] %v2371
      %2485 = vst [vmem:[%s282 + $0x280] sm:$0xff] %v2372
      %2486 = vst [vmem:[%s282 + $0x288] sm:$0xff] %v2373
      %2487 = vst [vmem:[%s282 + $0x290] sm:$0xff] %v2374
      %2488 = vst.msk [vmem:[%s282 + $0x298] sm:$0xff] %vm2410, %v2375
      %2489 = vst [vmem:[%s282 + $0x2a0] sm:$0xff] %v2376
      %2490 = vst [vmem:[%s282 + $0x2a8] sm:$0xff] %v2377
      %2491 = vst [vmem:[%s282 + $0x2b0] sm:$0xff] %v2378
      %2492 = vst [vmem:[%s282 + $0x2b8] sm:$0xff] %v2379
      %2493 = vst [vmem:[%s282 + $0x2c0] sm:$0xff] %v2380
      %2494 = vst [vmem:[%s282 + $0x2c8] sm:$0xff] %v2381
      %2495 = vst.msk [vmem:[%s282 + $0x2d0] sm:$0xff] %vm2410, %v2382
      %2496 = vst [vmem:[%s282 + $0x2d8] sm:$0xff] %v2383
      %2497 = vst [vmem:[%s282 + $0x2e0] sm:$0xff] %v2384
      %2498 = vst [vmem:[%s282 + $0x2e8] sm:$0xff] %v2385
      %2499 = vst [vmem:[%s282 + $0x2f0] sm:$0xff] %v2386
      %2500 = vst [vmem:[%s282 + $0x2f8] sm:$0xff] %v2387
      %2501 = vst [vmem:[%s282 + $0x300] sm:$0xff] %v2388
      %2502 = vst.msk [vmem:[%s282 + $0x308] sm:$0xff] %vm2410, %v2389
      %2503 = vst [vmem:[%s282 + $0x310] sm:$0xff] %v2390
      %2504 = vst [vmem:[%s282 + $0x318] sm:$0xff] %v2391
      %2505 = vst [vmem:[%s282 + $0x320] sm:$0xff] %v2392
      %2506 = vst [vmem:[%s282 + $0x328] sm:$0xff] %v2393
      %2507 = vst [vmem:[%s282 + $0x330] sm:$0xff] %v2394
      %2508 = vst [vmem:[%s282 + $0x338] sm:$0xff] %v2395
      %2509 = vst.msk [vmem:[%s282 + $0x340] sm:$0xff] %vm2410, %v2396
      %2510 = vst [vmem:[%s282 + $0x348] sm:$0xff] %v2397
      %2511 = vst [vmem:[%s282 + $0x350] sm:$0xff] %v2398
      %2512 = vst [vmem:[%s282 + $0x358] sm:$0xff] %v2399
      %2513 = vst [vmem:[%s282 + $0x360] sm:$0xff] %v2400
      %2514 = vst [vmem:[%s282 + $0x368] sm:$0xff] %v2401
      %2515 = vst [vmem:[%s282 + $0x370] sm:$0xff] %v2402
      %2516 = vst.msk [vmem:[%s282 + $0x378] sm:$0xff] %vm2410, %v2403
      %s2517 = smul.u32 16, %s18
      %p2518 = scmp.lt.s32.totalorder %s2517, 31
      %s2519 = scalar_select %p2518, %s2517, 31
      %s2520 = smul.addr %s2519, 7
      %s2521 = smul.addr %s2520, 8
      %s2522 = scalar_lea.vmem %s7, %s2521
      // Predicated region
      $region49: #{decoder_forward.1} parent=47 // pred_check
        %p2523 = pneg %p188
      $region50: #{decoder_forward.1} parent=47 // pred_check_branch
        %2525 = sbr.rel (%p2523) target = $region52
      $region51: #{decoder_forward.1} parent=47 // pred_region
        %s2526 = smul.u32 16, %s18
      $region52: #{decoder_forward.1} parent=47 // pred_fallthru
        _
    $region48: #{decoder_forward.1} parent=5 // pred_fallthru
      _
    %p2527 = scmp.le.s32.totalorder 2, %s13
    // Predicated region
    $region53: #{decoder_forward.1} parent=5 // pred_check
      %p2528 = pneg %p2527
    $region54: #{decoder_forward.1} parent=5 // pred_check_branch
      %2530 = sbr.rel (%p2528) target = $region56
    $region55: #{decoder_forward.1} parent=5 // pred_region
      %s2531 = ssub.s32 %s13, 2
      // Predicated region
      $region57: #{decoder_forward.1} parent=55 // pred_check
        %p2532 = pneg %p194
      $region58: #{decoder_forward.1} parent=55 // pred_check_branch
        %2534 = sbr.rel (%p2532) target = $region60
      $region59: #{decoder_forward.1} parent=55 // pred_region
        %s2535 = smul.u32 16, %s19
        %p2536 = scmp.lt.s32.totalorder %s2535, 31
        %s2537 = scalar_select %p2536, %s2535, 31
        %s2538 = smul.addr %s2537, 7
        %s2539 = smul.addr %s2538, 8
        %s2540 = scalar_lea.vmem %s7, %s2539
      $region60: #{decoder_forward.1} parent=55 // pred_fallthru
        _
    $region56: #{decoder_forward.1} parent=5 // pred_fallthru
      _
  $region6: #{decoder_forward.1} parent=0 // loop_footer
    %s17 = sadd.s32 1, %s13
  $region7: #{decoder_forward.1} parent=0 // loop_footer_branch
    %12 = sbr.rel target = $region3
  $region8: #{decoder_forward.1} parent=0 // loop_exit
    _

</llo_original>
